<compile_context>
chip_gen: v7x
topology: tpu7x:2x2x1
jax: 0.10.0
libtpu: 0.0.40
codegen_flags: <defaults>
</compile_context>

<pallas_src>
import functools

import jax
import jax.numpy as jnp
from jax.experimental import pallas as pl
from jax.experimental.pallas import tpu as pltpu

# ----------------------------------------------------------------------------
# EfficientNet-B0 stage configuration: (expand_ratio, kernel, stride, out_ch, repeats)
# ----------------------------------------------------------------------------
STAGES = (
    (1, 3, 1, 16, 1),
    (6, 3, 2, 24, 2),
    (6, 5, 2, 40, 2),
    (6, 3, 2, 80, 3),
    (6, 5, 1, 112, 3),
    (6, 5, 2, 192, 4),
    (6, 3, 1, 320, 1),
)
STEM_CH = 32
_XLA_FALLBACK_PIXELS = 64          # blocks with input H*W below this run in plain XLA


def _cdiv(a, b):
    return -(-a // b)


def _m_tile(m, target):
    """Row tiling: full block if small, else `target` (multiple of 8) with cdiv grid."""
    if m <= target:
        return m, 1
    return target, _cdiv(m, target)


def _n_tile(n):
    """Column tiling: full (lane) block up to 768 channels, else largest exact
    128-multiple tile (keeps stores lane-dense and >=256 wide on big expand layers)."""
    if n <= 768:
        return n, 1
    for t in (512, 384, 256, 128):
        if n % t == 0:
            return t, n // t
    return 512, _cdiv(n, 512)


def _pad128_if_cheap(c, max_waste=0.15):
    """Round channel count up to a 128 multiple when the inflation is small."""
    cp = _cdiv(c, 128) * 128
    return cp if (cp - c) <= max_waste * c else c


@functools.lru_cache(maxsize=None)
def _vmem_limit_bytes():
    """Bound the scoped-VMEM request per chip generation (v7x: 64 MiB physical)."""
    try:
        info = pltpu.get_tpu_info()
        cap = int(getattr(info, "vmem_capacity_bytes", 128 * 1024 * 1024))
    except Exception:
        cap = 64 * 1024 * 1024
    return int(min(cap * 3 // 4, 96 * 1024 * 1024))


def _act(y, act):
    if act == "silu":
        return y * jax.nn.sigmoid(y)
    if act == "sigmoid":
        return jax.nn.sigmoid(y)
    return y


# ----------------------------------------------------------------------------
# Kernel 1: fused matmul + bias + activation (stem conv via im2col, expand 1x1)
# ----------------------------------------------------------------------------
def _mm_kernel(x_ref, w_ref, b_ref, o_ref, *, act):
    # bf16 operands straight into the MXU, f32 accumulation / epilogue, bf16 store.
    y = jnp.dot(x_ref[...], w_ref[...], preferred_element_type=jnp.float32)
    o_ref[...] = _act(y + b_ref[...], act).astype(o_ref.dtype)


def matmul_bias_act(x, w, b, act="none"):
    """Fused (M,K)@(K,N) + bias + act, tiled over M (and N when large).
    K <= 1920 in this net so it stays a single block (no cross-step accumulator)."""
    x = x.astype(jnp.bfloat16)
    w = w.astype(jnp.bfloat16)
    M, K = x.shape
    N = w.shape[1]
    tm, gm = _m_tile(M, 512)
    tn, gn = _n_tile(N)
    return pl.pallas_call(
        functools.partial(_mm_kernel, act=act),
        out_shape=jax.ShapeDtypeStruct((M, N), jnp.bfloat16),
        grid=(gm, gn),
        in_specs=[
            pl.BlockSpec((tm, K), lambda i, j: (i, 0)),
            pl.BlockSpec((K, tn), lambda i, j: (0, j)),
            pl.BlockSpec((1, tn), lambda i, j: (0, j)),
        ],
        out_specs=pl.BlockSpec((tm, tn), lambda i, j: (i, j)),
        compiler_params=pltpu.CompilerParams(
            dimension_semantics=("parallel", "parallel")),
    )(x, w, b.reshape(1, N).astype(jnp.float32))


# ----------------------------------------------------------------------------
# Kernel 2: fused SE gating + 1x1 projection conv + folded-BN bias + residual add
# ----------------------------------------------------------------------------
def _proj_kernel(h_ref, s_ref, w_ref, b_ref, *rest, has_res):
    if has_res:
        res_ref, o_ref = rest
    else:
        (o_ref,) = rest
    x = h_ref[0] * s_ref[0]                              # SE gating fused at MXU input
    y = jnp.dot(x, w_ref[...], preferred_element_type=jnp.float32)
    y = y + b_ref[...]
    if has_res:
        y = y + res_ref[0].astype(jnp.float32)           # residual fused into epilogue
    o_ref[0] = y.astype(o_ref.dtype)


def conv1x1_proj_se_residual(h, s, w, b, shortcut):
    """One HBM read of the expanded activation, one write of the block output."""
    N, H, W, C = h.shape
    Cout = w.shape[1]
    HW = H * W
    tm, gm = _m_tile(HW, 512)
    h3 = h.astype(jnp.bfloat16).reshape(N, HW, C)
    s3 = s.astype(jnp.bfloat16).reshape(N, 1, C)
    inputs = [h3, s3, w.astype(jnp.bfloat16), b.reshape(1, Cout).astype(jnp.float32)]
    in_specs = [
        pl.BlockSpec((1, tm, C), lambda n, i: (n, i, 0)),
        pl.BlockSpec((1, 1, C), lambda n, i: (n, 0, 0)),
        pl.BlockSpec((C, Cout), lambda n, i: (0, 0)),
        pl.BlockSpec((1, Cout), lambda n, i: (0, 0)),
    ]
    has_res = shortcut is not None
    if has_res:
        inputs.append(shortcut.astype(jnp.bfloat16).reshape(N, HW, Cout))
        in_specs.append(pl.BlockSpec((1, tm, Cout), lambda n, i: (n, i, 0)))
    out = pl.pallas_call(
        functools.partial(_proj_kernel, has_res=has_res),
        out_shape=jax.ShapeDtypeStruct((N, HW, Cout), jnp.bfloat16),
        grid=(N, gm),
        in_specs=in_specs,
        out_specs=pl.BlockSpec((1, tm, Cout), lambda n, i: (n, i, 0)),
        compiler_params=pltpu.CompilerParams(
            dimension_semantics=("parallel", "parallel")),
    )(*inputs)
    return out.reshape(N, H, W, Cout)


# ----------------------------------------------------------------------------
# Kernel 3: depthwise KxK conv + folded-BN bias + SiLU, row-strip tiled
# ----------------------------------------------------------------------------
def _dw_kernel(x_ref, w_ref, b_ref, o_ref, *, K, stride, rs, R, act):
    """One output-row strip of one image.
    x_ref: (1, s*s*R, Wc, C) padded image (stride-phase decomposed when s>1, plain
    padded image when s==1), resident in VMEM per image.  o_ref: (1, rs, Wo, C).
    Taps are read directly from the ref with pl.ds offsets (no value-slice copies);
    only the strided output positions are ever computed."""
    Wo, C = o_ref.shape[2], o_ref.shape[3]
    s = stride
    r0 = pl.multiple_of(pl.program_id(1) * rs, rs)
    w = w_ref[...]                                          # (K*K, C) f32
    acc = jnp.zeros((rs, Wo, C), jnp.float32)
    for ph in range(s):
        for pw in range(s):
            p = ph * s + pw
            for kh in range(ph, K, s):
                for kw in range(pw, K, s):
                    dh, dw = kh // s, kw // s
                    tap = x_ref[0, pl.ds(p * R + r0 + dh, rs), pl.ds(dw, Wo), :]
                    acc = acc + tap * w[kh * K + kw].reshape(1, 1, C)
    acc = _act(acc + b_ref[...].reshape(1, 1, C), act)
    o_ref[0] = acc.astype(o_ref.dtype)


def dwconv_bias_act(x, w, b, K, stride, act="silu"):
    """Depthwise conv.  Grid = (image, output-row strip); both axes "parallel" so a
    single image can be split across v7x's two TensorCores.  The (rs, Wo, C)
    accumulator strip stays in registers; rs shrinks when it would exceed ~192KB."""
    x = x.astype(jnp.bfloat16)
    N, H, W, C = x.shape
    s = stride
    pad = K // 2
    Ho = (H + 2 * pad - K) // s + 1
    Wo = (W + 2 * pad - K) // s + 1
    rs = 8
    while rs > 2 and rs * Wo * C * 4 > 192 * 1024:          # keep acc out of spill range
        rs //= 2
    rs = min(rs, Ho)
    n_strips = _cdiv(Ho, rs)
    dmax = (K - 1) // s
    R = n_strips * rs + dmax                                # rows per phase (halo incl.)
    Wc = Wo + dmax                                          # cols per phase
    xp = jnp.pad(x, ((0, 0),
                     (pad, R * s - H - pad),
                     (pad, Wc * s - W - pad),
                     (0, 0)))
    if s == 1:
        phases = xp                                         # no phase pass for stride 1
    else:
        # phase (ph,pw)[r,c] == xp[r*s+ph, c*s+pw]; phases stacked along the row axis.
        phases = xp.reshape(N, R, s, Wc, s, C).transpose(0, 2, 4, 1, 3, 5)
        phases = phases.reshape(N, s * s * R, Wc, C)
    return pl.pallas_call(
        functools.partial(_dw_kernel, K=K, stride=s, rs=rs, R=R, act=act),
        out_shape=jax.ShapeDtypeStruct((N, Ho, Wo, C), jnp.bfloat16),
        grid=(N, n_strips),
        in_specs=[
            pl.BlockSpec((1, s * s * R, Wc, C), lambda n, r: (n, 0, 0, 0)),
            pl.BlockSpec((K * K, C), lambda n, r: (0, 0)),
            pl.BlockSpec((1, C), lambda n, r: (0, 0)),
        ],
        out_specs=pl.BlockSpec((1, rs, Wo, C), lambda n, r: (n, r, 0, 0)),
        compiler_params=pltpu.CompilerParams(
            dimension_semantics=("parallel", "parallel"),
            vmem_limit_bytes=_vmem_limit_bytes()),
    )(phases, w.astype(jnp.float32), b.reshape(1, C).astype(jnp.float32))
    # TODO(synk): for very large inputs, column-tile the resident image (halo in W) so
    # per-image VMEM residency is independent of resolution.


# ----------------------------------------------------------------------------
# Glue: stem conv (im2col), pointwise conv, MBConv block, XLA fallback, forward
# ----------------------------------------------------------------------------
def conv2d_im2col(x, w, b, K, stride, pad, act):
    """Stem KxK conv: im2col patch extraction in XLA + fused Pallas matmul."""
    N, H, W, Cin = x.shape
    xp = jnp.pad(x, ((0, 0), (pad, pad), (pad, pad), (0, 0)))
    Ho = (H + 2 * pad - K) // stride + 1
    Wo = (W + 2 * pad - K) // stride + 1
    cols = []
    for kh in range(K):
        for kw in range(K):
            cols.append(xp[:, kh:kh + stride * (Ho - 1) + 1:stride,
                              kw:kw + stride * (Wo - 1) + 1:stride, :])
    patches = jnp.concatenate(cols, axis=-1).reshape(N * Ho * Wo, K * K * Cin)
    return matmul_bias_act(patches, w, b, act).reshape(N, Ho, Wo, -1)


def conv1x1(x, w, b, act):
    N, H, W, C = x.shape
    y = matmul_bias_act(x.reshape(N * H * W, C), w, b, act)
    return y.reshape(N, H, W, -1)


def _mbconv_xla(x, p, cout, k, stride, expand):
    """Plain-XLA MBConv for tiny late-stage feature maps (pallas launch = overhead)."""
    xf = x.astype(jnp.float32)
    shortcut = xf if (stride == 1 and x.shape[-1] == cout) else None
    h = xf
    if expand != 1:
        h = jax.nn.silu(h @ p["pw_exp_w"].astype(jnp.float32) + p["pw_exp_b"])
    C = h.shape[-1]
    pad = k // 2
    wk = p["dw_w"].reshape(k, k, C)[:, :, None, :]
    h = jax.lax.conv_general_dilated(
        h, wk, (stride, stride), [(pad, pad), (pad, pad)],
        dimension_numbers=("NHWC", "HWIO", "NHWC"), feature_group_count=C,
        precision=jax.lax.Precision.HIGHEST)
    h = jax.nn.silu(h + p["dw_b"])
    s = jnp.mean(h, axis=(1, 2))
    s = jax.nn.silu(s @ p["se_r_w"] + p["se_r_b"])
    s = jax.nn.sigmoid(s @ p["se_e_w"] + p["se_e_b"])
    y = (h * s[:, None, None, :]) @ p["pw_proj_w"].astype(jnp.float32) + p["pw_proj_b"]
    if shortcut is not None:
        y = y + shortcut
    return y.astype(jnp.bfloat16)


def mbconv(x, p, cin, cout, k, stride, expand):
    N, H, W, _ = x.shape
    if H * W < _XLA_FALLBACK_PIXELS:
        return _mbconv_xla(x, p, cout, k, stride, expand)
    shortcut = x if (stride == 1 and cin == cout) else None
    h = x
    if expand != 1:
        h = conv1x1(h, p["pw_exp_w"], p["pw_exp_b"], act="silu")   # expand (BN+SiLU folded)
    h = dwconv_bias_act(h, p["dw_w"], p["dw_b"], k, stride, act="silu")
    # Squeeze-and-Excitation FC layers (M == batch) stay in XLA; the gating itself is
    # fused into the projection kernel below.
    s = jnp.mean(h.astype(jnp.float32), axis=(1, 2))
    s = jax.nn.silu(s @ p["se_r_w"] + p["se_r_b"])
    s = jax.nn.sigmoid(s @ p["se_e_w"] + p["se_e_b"])
    # Fused: SE gating * h -> 1x1 projection (+ folded BN bias) -> + residual.
    return conv1x1_proj_se_residual(h, s, p["pw_proj_w"], p["pw_proj_b"], shortcut)


def image_processor_forward(x_nchw, params):
    """Equivalent of ImageProcessor.forward: last feature map of efficientnet_b0
    features_only -> [N, 320, H/32, W/32] (NCHW, float32)."""
    x = jnp.transpose(x_nchw, (0, 2, 3, 1)).astype(jnp.float32)      # NCHW -> NHWC
    x = conv2d_im2col(x, params["stem_w"], params["stem_b"],
                      K=3, stride=2, pad=1, act="silu")
    cin, bi = STEM_CH, 0
    for (e, k, s, cout, r) in STAGES:
        for rep in range(r):
            stride = s if rep == 0 else 1
            x = mbconv(x, params["blocks"][bi], cin, cout, k, stride, e)
            cin = cout
            bi += 1
    return jnp.transpose(x.astype(jnp.float32), (0, 3, 1, 2))        # NHWC -> NCHW


# ----------------------------------------------------------------------------
# Deterministic synthetic parameters (BN folded into conv scale/bias at init).
# Expanded (cmid) channels are zero-padded to a 128 multiple when waste <= 15% so
# the padded lanes are mathematically inert but the stores stay lane-dense.
# ----------------------------------------------------------------------------
def init_params(key):
    keys = iter(jax.random.split(key, 512))

    def winit(shape, fan_in, dtype=jnp.float32):
        w = jax.random.normal(next(keys), shape, jnp.float32) / jnp.sqrt(float(fan_in))
        return w.astype(dtype)

    def binit(shape):
        return 0.01 * jax.random.normal(next(keys), shape, jnp.float32)

    params = {
        "stem_w": winit((3 * 3 * 3, STEM_CH), 3 * 3 * 3, jnp.bfloat16),
        "stem_b": binit((STEM_CH,)),
        "blocks": [],
    }
    cin = STEM_CH
    for (e, k, s, cout, r) in STAGES:
        for _ in range(r):
            cmid = cin * e
            cmid_p = _pad128_if_cheap(cmid) if e != 1 else cmid
            dpad = cmid_p - cmid
            se_c = max(1, cin // 4)
            p = {}
            if e != 1:
                p["pw_exp_w"] = jnp.pad(winit((cin, cmid), cin, jnp.bfloat16),
                                        ((0, 0), (0, dpad)))
                p["pw_exp_b"] = jnp.pad(binit((cmid,)), (0, dpad))
            p["dw_w"] = jnp.pad(winit((k * k, cmid), k * k), ((0, 0), (0, dpad)))
            p["dw_b"] = jnp.pad(binit((cmid,)), (0, dpad))
            p["se_r_w"] = jnp.pad(winit((cmid, se_c), cmid), ((0, dpad), (0, 0)))
            p["se_r_b"] = binit((se_c,))
            p["se_e_w"] = jnp.pad(winit((se_c, cmid), se_c), ((0, 0), (0, dpad)))
            p["se_e_b"] = jnp.pad(binit((cmid,)), (0, dpad))
            p["pw_proj_w"] = jnp.pad(winit((cmid, cout), cmid, jnp.bfloat16),
                                     ((0, dpad), (0, 0)))
            p["pw_proj_b"] = binit((cout,))
            params["blocks"].append(p)
            cin = cout
    return params


# TODO(synk): pretrained timm checkpoint weights cannot be loaded here; parameters are
# deterministic synthetic values with the exact efficientnet_b0 architecture/shapes.

if __name__ == "__main__":
    key = jax.random.PRNGKey(0)
    pkey, xkey, ckey = jax.random.split(key, 3)
    params = init_params(pkey)

    # ---------------- per-kernel numerical checks against XLA references -----------
    def _dw_reference(xb, w, b, K, stride):
        xf = xb.astype(jnp.float32)
        C = xf.shape[-1]
        pad = K // 2
        wk = w.reshape(K, K, C)[:, :, None, :]
        y = jax.lax.conv_general_dilated(
            xf, wk, (stride, stride), [(pad, pad), (pad, pad)],
            dimension_numbers=("NHWC", "HWIO", "NHWC"), feature_group_count=C,
            precision=jax.lax.Precision.HIGHEST)
        return jax.nn.silu(y + b)

    k1, k2, k3, k4, k5, k6, k7 = jax.random.split(ckey, 7)
    xt = jax.random.normal(k1, (2, 19, 21, 32), jnp.float32).astype(jnp.bfloat16)
    wt = 0.2 * jax.random.normal(k2, (25, 32), jnp.float32)
    bt = 0.1 * jax.random.normal(k3, (32,), jnp.float32)
    for (kk, ss) in ((3, 1), (3, 2), (5, 1), (5, 2)):
        got = dwconv_bias_act(xt, wt[:kk * kk], bt, kk, ss).astype(jnp.float32)
        ref = _dw_reference(xt, wt[:kk * kk], bt, kk, ss)
        assert got.shape == ref.shape, (got.shape, ref.shape)
        err = float(jnp.max(jnp.abs(got - ref)))
        assert err < 5e-2, ("dwconv mismatch", kk, ss, err)

    xm = jax.random.normal(k4, (320, 96), jnp.float32).astype(jnp.bfloat16)
    wm = (jax.random.normal(k5, (96, 144), jnp.float32) / jnp.sqrt(96.0)
          ).astype(jnp.bfloat16)
    bm = 0.01 * jnp.ones((144,), jnp.float32)
    got = matmul_bias_act(xm, wm, bm, act="silu").astype(jnp.float32)
    ref = jax.nn.silu(jnp.dot(xm.astype(jnp.float32), wm.astype(jnp.float32),
                              precision=jax.lax.Precision.HIGHEST) + bm)
    assert float(jnp.max(jnp.abs(got - ref))) < 5e-2, "matmul_bias_act mismatch"

    hh = jax.random.normal(k6, (2, 16, 16, 256), jnp.float32).astype(jnp.bfloat16)
    sg = jax.nn.sigmoid(jax.random.normal(k7, (2, 256), jnp.float32))
    wp = (jax.random.normal(k5, (256, 80), jnp.float32) / 16.0).astype(jnp.bfloat16)
    bp = 0.01 * jnp.ones((80,), jnp.float32)
    sc = jax.random.normal(k4, (2, 16, 16, 80), jnp.float32).astype(jnp.bfloat16)
    got = conv1x1_proj_se_residual(hh, sg, wp, bp, sc).astype(jnp.float32)
    ref = (jnp.matmul(hh.astype(jnp.float32) * sg[:, None, None, :],
                      wp.astype(jnp.float32),
                      precision=jax.lax.Precision.HIGHEST)
           + bp + sc.astype(jnp.float32))
    assert float(jnp.max(jnp.abs(got - ref))) < 5e-2, "projection kernel mismatch"

    # ---------------- full forward ---------------------------------------------------
    x = jax.random.normal(xkey, (2, 3, 64, 64), jnp.float32)
    fwd = jax.jit(image_processor_forward)
    out = jax.block_until_ready(fwd(x, params))

    assert out.shape == (2, 320, 2, 2), out.shape
    assert bool(jnp.all(jnp.isfinite(out)))
    print("KERNEL_OK")
</pallas_src>

<mosaic_0001>
module attributes {stable_mosaic.version = 11 : i64} {
  func.func @_dw_kernel(%arg0: i32, %arg1: i32, %arg2: memref<1x26x23x32xbf16, #tpu.memory_space<vmem>>, %arg3: memref<9x32xf32, #tpu.memory_space<vmem>>, %arg4: memref<1x32xf32, #tpu.memory_space<vmem>>, %arg5: memref<1x8x21x32xbf16, #tpu.memory_space<vmem>>) attributes {dimension_semantics = [#tpu.dimension_semantics<parallel>, #tpu.dimension_semantics<parallel>], iteration_bounds = array<i64: 2, 3>, scalar_prefetch = 0 : i64, scratch_operands = 0 : i64, tpu.core_type = #tpu.core_type<tc>, window_params = [{transform_indices = @transform_0, window_bounds = array<i64: 1, 26, 23, 32>}, {pipeline_mode = #tpu.pipeline_mode<synchronous>, transform_indices = @transform_1, window_bounds = array<i64: 9, 32>}, {pipeline_mode = #tpu.pipeline_mode<synchronous>, transform_indices = @transform_2, window_bounds = array<i64: 1, 32>}, {transform_indices = @transform_3, window_bounds = array<i64: 1, 8, 21, 32>}]} {
    %c8_i32 = arith.constant 8 : i32
    %0 = arith.muli %arg1, %c8_i32 : i32
    %1 = tpu.assume_multiple %0, 8 : i32
    %c0 = arith.constant 0 : index
    %c0_0 = arith.constant 0 : index
    %2 = vector.load %arg3[%c0, %c0_0] : memref<9x32xf32, #tpu.memory_space<vmem>>, vector<9x32xf32>
    %cst = arith.constant 0.000000e+00 : f32
    %3 = vector.broadcast %cst : f32 to vector<8x21x32xf32>
    %c0_i32 = arith.constant 0 : i32
    %4 = arith.addi %c0_i32, %1 : i32
    %c0_i32_1 = arith.constant 0 : i32
    %5 = arith.addi %4, %c0_i32_1 : i32
    %c0_2 = arith.constant 0 : index
    %6 = arith.index_cast %5 : i32 to index
    %c0_3 = arith.constant 0 : index
    %c0_4 = arith.constant 0 : index
    %7 = vector.load %arg2[%c0_2, %6, %c0_3, %c0_4] : memref<1x26x23x32xbf16, #tpu.memory_space<vmem>>, vector<1x8x21x32xbf16>
    %8 = vector.shape_cast %7 : vector<1x8x21x32xbf16> to vector<8x21x32xbf16>
    %9 = vector.extract_strided_slice %2 {offsets = [0, 0], sizes = [1, 32], strides = [1, 1]} : vector<9x32xf32> to vector<1x32xf32>
    %10 = vector.shape_cast %9 : vector<1x32xf32> to vector<32xf32>
    %11 = vector.shape_cast %10 : vector<32xf32> to vector<1x1x32xf32>
    %12 = arith.extf %8 : vector<8x21x32xbf16> to vector<8x21x32xf32>
    %13 = vector.broadcast %11 : vector<1x1x32xf32> to vector<8x21x32xf32>
    %14 = arith.mulf %12, %13 : vector<8x21x32xf32>
    %15 = arith.addf %3, %14 : vector<8x21x32xf32>
    %c0_i32_5 = arith.constant 0 : i32
    %16 = arith.addi %c0_i32_5, %1 : i32
    %c0_i32_6 = arith.constant 0 : i32
    %17 = arith.addi %16, %c0_i32_6 : i32
    %c0_7 = arith.constant 0 : index
    %18 = arith.index_cast %17 : i32 to index
    %c1 = arith.constant 1 : index
    %c0_8 = arith.constant 0 : index
    %19 = vector.load %arg2[%c0_7, %18, %c1, %c0_8] : memref<1x26x23x32xbf16, #tpu.memory_space<vmem>>, vector<1x8x21x32xbf16>
    %20 = vector.shape_cast %19 : vector<1x8x21x32xbf16> to vector<8x21x32xbf16>
    %21 = vector.extract_strided_slice %2 {offsets = [1, 0], sizes = [1, 32], strides = [1, 1]} : vector<9x32xf32> to vector<1x32xf32>
    %22 = vector.shape_cast %21 : vector<1x32xf32> to vector<32xf32>
    %23 = vector.shape_cast %22 : vector<32xf32> to vector<1x1x32xf32>
    %24 = arith.extf %20 : vector<8x21x32xbf16> to vector<8x21x32xf32>
    %25 = vector.broadcast %23 : vector<1x1x32xf32> to vector<8x21x32xf32>
    %26 = arith.mulf %24, %25 : vector<8x21x32xf32>
    %27 = arith.addf %15, %26 : vector<8x21x32xf32>
    %c0_i32_9 = arith.constant 0 : i32
    %28 = arith.addi %c0_i32_9, %1 : i32
    %c0_i32_10 = arith.constant 0 : i32
    %29 = arith.addi %28, %c0_i32_10 : i32
    %c0_11 = arith.constant 0 : index
    %30 = arith.index_cast %29 : i32 to index
    %c2 = arith.constant 2 : index
    %c0_12 = arith.constant 0 : index
    %31 = vector.load %arg2[%c0_11, %30, %c2, %c0_12] : memref<1x26x23x32xbf16, #tpu.memory_space<vmem>>, vector<1x8x21x32xbf16>
    %32 = vector.shape_cast %31 : vector<1x8x21x32xbf16> to vector<8x21x32xbf16>
    %33 = vector.extract_strided_slice %2 {offsets = [2, 0], sizes = [1, 32], strides = [1, 1]} : vector<9x32xf32> to vector<1x32xf32>
    %34 = vector.shape_cast %33 : vector<1x32xf32> to vector<32xf32>
    %35 = vector.shape_cast %34 : vector<32xf32> to vector<1x1x32xf32>
    %36 = arith.extf %32 : vector<8x21x32xbf16> to vector<8x21x32xf32>
    %37 = vector.broadcast %35 : vector<1x1x32xf32> to vector<8x21x32xf32>
    %38 = arith.mulf %36, %37 : vector<8x21x32xf32>
    %39 = arith.addf %27, %38 : vector<8x21x32xf32>
    %c0_i32_13 = arith.constant 0 : i32
    %40 = arith.addi %c0_i32_13, %1 : i32
    %c1_i32 = arith.constant 1 : i32
    %41 = arith.addi %40, %c1_i32 : i32
    %c0_14 = arith.constant 0 : index
    %42 = arith.index_cast %41 : i32 to index
    %c0_15 = arith.constant 0 : index
    %c0_16 = arith.constant 0 : index
    %43 = vector.load %arg2[%c0_14, %42, %c0_15, %c0_16] : memref<1x26x23x32xbf16, #tpu.memory_space<vmem>>, vector<1x8x21x32xbf16>
    %44 = vector.shape_cast %43 : vector<1x8x21x32xbf16> to vector<8x21x32xbf16>
    %45 = vector.extract_strided_slice %2 {offsets = [3, 0], sizes = [1, 32], strides = [1, 1]} : vector<9x32xf32> to vector<1x32xf32>
    %46 = vector.shape_cast %45 : vector<1x32xf32> to vector<32xf32>
    %47 = vector.shape_cast %46 : vector<32xf32> to vector<1x1x32xf32>
    %48 = arith.extf %44 : vector<8x21x32xbf16> to vector<8x21x32xf32>
    %49 = vector.broadcast %47 : vector<1x1x32xf32> to vector<8x21x32xf32>
    %50 = arith.mulf %48, %49 : vector<8x21x32xf32>
    %51 = arith.addf %39, %50 : vector<8x21x32xf32>
    %c0_i32_17 = arith.constant 0 : i32
    %52 = arith.addi %c0_i32_17, %1 : i32
    %c1_i32_18 = arith.constant 1 : i32
    %53 = arith.addi %52, %c1_i32_18 : i32
    %c0_19 = arith.constant 0 : index
    %54 = arith.index_cast %53 : i32 to index
    %c1_20 = arith.constant 1 : index
    %c0_21 = arith.constant 0 : index
    %55 = vector.load %arg2[%c0_19, %54, %c1_20, %c0_21] : memref<1x26x23x32xbf16, #tpu.memory_space<vmem>>, vector<1x8x21x32xbf16>
    %56 = vector.shape_cast %55 : vector<1x8x21x32xbf16> to vector<8x21x32xbf16>
    %57 = vector.extract_strided_slice %2 {offsets = [4, 0], sizes = [1, 32], strides = [1, 1]} : vector<9x32xf32> to vector<1x32xf32>
    %58 = vector.shape_cast %57 : vector<1x32xf32> to vector<32xf32>
    %59 = vector.shape_cast %58 : vector<32xf32> to vector<1x1x32xf32>
    %60 = arith.extf %56 : vector<8x21x32xbf16> to vector<8x21x32xf32>
    %61 = vector.broadcast %59 : vector<1x1x32xf32> to vector<8x21x32xf32>
    %62 = arith.mulf %60, %61 : vector<8x21x32xf32>
    %63 = arith.addf %51, %62 : vector<8x21x32xf32>
    %c0_i32_22 = arith.constant 0 : i32
    %64 = arith.addi %c0_i32_22, %1 : i32
    %c1_i32_23 = arith.constant 1 : i32
    %65 = arith.addi %64, %c1_i32_23 : i32
    %c0_24 = arith.constant 0 : index
    %66 = arith.index_cast %65 : i32 to index
    %c2_25 = arith.constant 2 : index
    %c0_26 = arith.constant 0 : index
    %67 = vector.load %arg2[%c0_24, %66, %c2_25, %c0_26] : memref<1x26x23x32xbf16, #tpu.memory_space<vmem>>, vector<1x8x21x32xbf16>
    %68 = vector.shape_cast %67 : vector<1x8x21x32xbf16> to vector<8x21x32xbf16>
    %69 = vector.extract_strided_slice %2 {offsets = [5, 0], sizes = [1, 32], strides = [1, 1]} : vector<9x32xf32> to vector<1x32xf32>
    %70 = vector.shape_cast %69 : vector<1x32xf32> to vector<32xf32>
    %71 = vector.shape_cast %70 : vector<32xf32> to vector<1x1x32xf32>
    %72 = arith.extf %68 : vector<8x21x32xbf16> to vector<8x21x32xf32>
    %73 = vector.broadcast %71 : vector<1x1x32xf32> to vector<8x21x32xf32>
    %74 = arith.mulf %72, %73 : vector<8x21x32xf32>
    %75 = arith.addf %63, %74 : vector<8x21x32xf32>
    %c0_i32_27 = arith.constant 0 : i32
    %76 = arith.addi %c0_i32_27, %1 : i32
    %c2_i32 = arith.constant 2 : i32
    %77 = arith.addi %76, %c2_i32 : i32
    %c0_28 = arith.constant 0 : index
    %78 = arith.index_cast %77 : i32 to index
    %c0_29 = arith.constant 0 : index
    %c0_30 = arith.constant 0 : index
    %79 = vector.load %arg2[%c0_28, %78, %c0_29, %c0_30] : memref<1x26x23x32xbf16, #tpu.memory_space<vmem>>, vector<1x8x21x32xbf16>
    %80 = vector.shape_cast %79 : vector<1x8x21x32xbf16> to vector<8x21x32xbf16>
    %81 = vector.extract_strided_slice %2 {offsets = [6, 0], sizes = [1, 32], strides = [1, 1]} : vector<9x32xf32> to vector<1x32xf32>
    %82 = vector.shape_cast %81 : vector<1x32xf32> to vector<32xf32>
    %83 = vector.shape_cast %82 : vector<32xf32> to vector<1x1x32xf32>
    %84 = arith.extf %80 : vector<8x21x32xbf16> to vector<8x21x32xf32>
    %85 = vector.broadcast %83 : vector<1x1x32xf32> to vector<8x21x32xf32>
    %86 = arith.mulf %84, %85 : vector<8x21x32xf32>
    %87 = arith.addf %75, %86 : vector<8x21x32xf32>
    %c0_i32_31 = arith.constant 0 : i32
    %88 = arith.addi %c0_i32_31, %1 : i32
    %c2_i32_32 = arith.constant 2 : i32
    %89 = arith.addi %88, %c2_i32_32 : i32
    %c0_33 = arith.constant 0 : index
    %90 = arith.index_cast %89 : i32 to index
    %c1_34 = arith.constant 1 : index
    %c0_35 = arith.constant 0 : index
    %91 = vector.load %arg2[%c0_33, %90, %c1_34, %c0_35] : memref<1x26x23x32xbf16, #tpu.memory_space<vmem>>, vector<1x8x21x32xbf16>
    %92 = vector.shape_cast %91 : vector<1x8x21x32xbf16> to vector<8x21x32xbf16>
    %93 = vector.extract_strided_slice %2 {offsets = [7, 0], sizes = [1, 32], strides = [1, 1]} : vector<9x32xf32> to vector<1x32xf32>
    %94 = vector.shape_cast %93 : vector<1x32xf32> to vector<32xf32>
    %95 = vector.shape_cast %94 : vector<32xf32> to vector<1x1x32xf32>
    %96 = arith.extf %92 : vector<8x21x32xbf16> to vector<8x21x32xf32>
    %97 = vector.broadcast %95 : vector<1x1x32xf32> to vector<8x21x32xf32>
    %98 = arith.mulf %96, %97 : vector<8x21x32xf32>
    %99 = arith.addf %87, %98 : vector<8x21x32xf32>
    %c0_i32_36 = arith.constant 0 : i32
    %100 = arith.addi %c0_i32_36, %1 : i32
    %c2_i32_37 = arith.constant 2 : i32
    %101 = arith.addi %100, %c2_i32_37 : i32
    %c0_38 = arith.constant 0 : index
    %102 = arith.index_cast %101 : i32 to index
    %c2_39 = arith.constant 2 : index
    %c0_40 = arith.constant 0 : index
    %103 = vector.load %arg2[%c0_38, %102, %c2_39, %c0_40] : memref<1x26x23x32xbf16, #tpu.memory_space<vmem>>, vector<1x8x21x32xbf16>
    %104 = vector.shape_cast %103 : vector<1x8x21x32xbf16> to vector<8x21x32xbf16>
    %105 = vector.extract_strided_slice %2 {offsets = [8, 0], sizes = [1, 32], strides = [1, 1]} : vector<9x32xf32> to vector<1x32xf32>
    %106 = vector.shape_cast %105 : vector<1x32xf32> to vector<32xf32>
    %107 = vector.shape_cast %106 : vector<32xf32> to vector<1x1x32xf32>
    %108 = arith.extf %104 : vector<8x21x32xbf16> to vector<8x21x32xf32>
    %109 = vector.broadcast %107 : vector<1x1x32xf32> to vector<8x21x32xf32>
    %110 = arith.mulf %108, %109 : vector<8x21x32xf32>
    %111 = arith.addf %99, %110 : vector<8x21x32xf32>
    %c0_41 = arith.constant 0 : index
    %c0_42 = arith.constant 0 : index
    %112 = vector.load %arg4[%c0_41, %c0_42] : memref<1x32xf32, #tpu.memory_space<vmem>>, vector<1x32xf32>
    %113 = vector.shape_cast %112 : vector<1x32xf32> to vector<1x1x32xf32>
    %114 = vector.broadcast %113 : vector<1x1x32xf32> to vector<8x21x32xf32>
    %115 = arith.addf %111, %114 : vector<8x21x32xf32>
    %116 = arith.negf %115 : vector<8x21x32xf32>
    %117 = math.exp %116 : vector<8x21x32xf32>
    %cst_43 = arith.constant 1.000000e+00 : f32
    %118 = vector.broadcast %cst_43 : f32 to vector<8x21x32xf32>
    %119 = arith.addf %118, %117 : vector<8x21x32xf32>
    %120 = arith.divf %118, %119 : vector<8x21x32xf32>
    %121 = arith.mulf %115, %120 : vector<8x21x32xf32>
    %122 = arith.truncf %121 : vector<8x21x32xf32> to vector<8x21x32xbf16>
    %c0_44 = arith.constant 0 : index
    %c0_45 = arith.constant 0 : index
    %c0_46 = arith.constant 0 : index
    %c0_47 = arith.constant 0 : index
    %123 = vector.load %arg5[%c0_44, %c0_45, %c0_46, %c0_47] : memref<1x8x21x32xbf16, #tpu.memory_space<vmem>>, vector<1x8x21x32xbf16>
    %124 = vector.shape_cast %123 : vector<1x8x21x32xbf16> to vector<8x21x32xbf16>
    %125 = vector.shape_cast %122 : vector<8x21x32xbf16> to vector<1x8x21x32xbf16>
    tpu.vector_store %arg5[%c0_44, %c0_45, %c0_46, %c0_47], %125 {strides = array<i32>} : memref<1x8x21x32xbf16, #tpu.memory_space<vmem>>, vector<1x8x21x32xbf16>,
    return
  }
  func.func @transform_0(%arg0: i32, %arg1: i32) -> (i32, i32, i32, i32) {
    %c0_i32 = arith.constant 0 : i32
    %c0_i32_0 = arith.constant 0 : i32
    %c0_i32_1 = arith.constant 0 : i32
    %c0_i32_2 = arith.constant 0 : i32
    return %arg0, %c0_i32, %c0_i32_0, %c0_i32_1 : i32, i32, i32, i32
  }
  func.func @transform_1(%arg0: i32, %arg1: i32) -> (i32, i32) {
    %c0_i32 = arith.constant 0 : i32
    %c0_i32_0 = arith.constant 0 : i32
    %c0_i32_1 = arith.constant 0 : i32
    return %c0_i32, %c0_i32_0 : i32, i32
  }
  func.func @transform_2(%arg0: i32, %arg1: i32) -> (i32, i32) {
    %c0_i32 = arith.constant 0 : i32
    %c0_i32_0 = arith.constant 0 : i32
    %c0_i32_1 = arith.constant 0 : i32
    return %c0_i32, %c0_i32_0 : i32, i32
  }
  func.func @transform_3(%arg0: i32, %arg1: i32) -> (i32, i32, i32, i32) {
    %c0_i32 = arith.constant 0 : i32
    %c0_i32_0 = arith.constant 0 : i32
    %c0_i32_1 = arith.constant 0 : i32
    return %arg0, %arg1, %c0_i32, %c0_i32_0 : i32, i32, i32, i32
  }
}

</mosaic_0001>

<llo_original>
// kernel: tpu_custom_call.1
$region0: #{tpu_custom_call.1}
  #allocation0 [shape = 'u32[]', space=smem, size = 0x4, offset = 0x4, fixed_abs, tag = 'smem constant byte address 0x4 - core index']
  #allocation1 [shape = 'u32[144,128]{1,0:T(1,128)}', space=vmem, size = 0x12000, scoped, tag = 'internal scratch']
  %s0 = inlined_call_operand.vmem [shape: bf16[2,26,23,32], index: 0, kind: input, shape index: {}]
  %s1 = inlined_call_operand.vmem [shape: f32[9,32], index: 1, kind: input, shape index: {}]
  %s2 = inlined_call_operand.vmem [shape: f32[1,32], index: 2, kind: input, shape index: {}]
  %s3 = inlined_call_operand.vmem [shape: bf16[2,19,21,32], index: 3, kind: output, shape index: {}]
  %s4 = sld [smem:[#allocation0]]
  $region89: #{tpu_custom_call.1} parent=0
    _
  %s6 = ssub.s32 1, %s4
  %s7 = scalar_select 0, %s6, %s4
  $region1: #{tpu_custom_call.1} parent=0
    #allocation2 [shape = 'u8[98304]{0}', space=vmem, size = 0x18000, scoped, tag = 'output window, operand 0']
    loop: start=0, step=1, limit=8
    $region2: #{tpu_custom_call.1} parent=1 // loop_pre_header
      _
    $region3: #{tpu_custom_call.1} parent=1 // loop_header
      %s9 = sphi 0, %s13
      %p10 = scmp.ge.s32.totalorder %s9, 8
      %s16 = sphi 0, %s28
      %s17 = sphi 0, %s24
      %s18 = sphi 0, %s16
      %s19 = sphi 0, %s17
      %s20 = sphi 0, %s18
      %s21 = sphi 0, %s19
      %s31 = sphi 0, %s33
      %s34 = sphi 0, %s31
      %s35 = sphi 0, %s34
      %s51 = sphi 0, %s35
      %s55 = sphi 0, %s55
      %s57 = sphi 0, %s55
      %s58 = sphi 0, %s57
      %s72 = sphi 0, %s58
      %s76 = sphi 0, %s76
      %s78 = sphi 0, %s76
      %s79 = sphi 0, %s78
      %s93 = sphi 0, %s79
      %s101 = sphi 0, %s103
      %s104 = sphi 0, %s101
      %s105 = sphi 0, %s104
      %s121 = sphi 0, %s105
    $region4: #{tpu_custom_call.1} parent=1 // loop_header_branch
      %12 = sbr.rel (%p10) target = $region8
    $region5: #{tpu_custom_call.1} parent=1 // loop_body
      %s14 = ssub.s32 %s9, 1
      %s15 = ssub.s32 %s9, 2
      %s22 = sadd.s32 1, %s17
      %p23 = scmp.ge.s32.totalorder %s22, 3
      %s24 = scalar_select %p23, 0, %s22
      %s25 = sadd.s32 1, %s16
      %s26 = scalar_select %p23, %s25, %s16
      %p27 = scmp.ge.s32.totalorder %s26, 2
      %s28 = scalar_select %p27, 0, %s26
      %s29 = ssub.s32 %s16, %s28
      %p30 = scmp.eq.s32.totalorder %s29, 0
      %s32 = sadd.s32 %s31, 1
      %s33 = scalar_select %p30, %s31, %s32
      %p36 = pneg %p30
      %p37 = scmp.eq.s32.totalorder %s9, 5
      %p38 = por %p36, %p37
      %p39 = scmp.ne.s32.totalorder %s31, %s34
      %p40 = scmp.eq.s32.totalorder %s9, 0
      %p41 = por %p39, %p40
      %p42 = scmp.ne.s32.totalorder %s31, %s34
      %p43 = scmp.eq.s32.totalorder %s14, 5
      %p44 = por %p42, %p43
      %p45 = scmp.ne.s32.totalorder %s34, %s35
      %p46 = scmp.eq.s32.totalorder %s14, 0
      %p47 = por %p45, %p46
      %p48 = scmp.ne.s32.totalorder %s34, %s35
      %p49 = scmp.eq.s32.totalorder %s15, 5
      %p50 = por %p48, %p49
      %p52 = scmp.ne.s32.totalorder %s35, %s51
      %p53 = scmp.eq.s32.totalorder %s15, 0
      %p54 = por %p52, %p53
      %s56 = sadd.s32 %s55, 1
      %p59 = scmp.eq.s32.totalorder %s9, 5
      %p60 = scmp.ne.s32.totalorder %s55, %s57
      %p61 = scmp.eq.s32.totalorder %s9, 0
      %p62 = por %p60, %p61
      %p63 = scmp.ne.s32.totalorder %s55, %s57
      %p64 = scmp.eq.s32.totalorder %s14, 5
      %p65 = por %p63, %p64
      %p66 = scmp.ne.s32.totalorder %s57, %s58
      %p67 = scmp.eq.s32.totalorder %s14, 0
      %p68 = por %p66, %p67
      %p69 = scmp.ne.s32.totalorder %s57, %s58
      %p70 = scmp.eq.s32.totalorder %s15, 5
      %p71 = por %p69, %p70
      %p73 = scmp.ne.s32.totalorder %s58, %s72
      %p74 = scmp.eq.s32.totalorder %s15, 0
      %p75 = por %p73, %p74
      %s77 = sadd.s32 %s76, 1
      %p80 = scmp.eq.s32.totalorder %s9, 5
      %p81 = scmp.ne.s32.totalorder %s76, %s78
      %p82 = scmp.eq.s32.totalorder %s9, 0
      %p83 = por %p81, %p82
      %p84 = scmp.ne.s32.totalorder %s76, %s78
      %p85 = scmp.eq.s32.totalorder %s14, 5
      %p86 = por %p84, %p85
      %p87 = scmp.ne.s32.totalorder %s78, %s79
      %p88 = scmp.eq.s32.totalorder %s14, 0
      %p89 = por %p87, %p88
      %p90 = scmp.ne.s32.totalorder %s78, %s79
      %p91 = scmp.eq.s32.totalorder %s15, 5
      %p92 = por %p90, %p91
      %p94 = scmp.ne.s32.totalorder %s79, %s93
      %p95 = scmp.eq.s32.totalorder %s15, 0
      %p96 = por %p94, %p95
      %s97 = ssub.s32 %s16, %s28
      %s98 = ssub.s32 %s17, %s24
      %s99 = sor.u32 %s97, %s98
      %p100 = scmp.eq.s32.totalorder %s99, 0
      %s102 = sadd.s32 %s101, 1
      %s103 = scalar_select %p100, %s101, %s102
      %p106 = pneg %p100
      %p107 = scmp.eq.s32.totalorder %s9, 5
      %p108 = por %p106, %p107
      %p109 = scmp.ne.s32.totalorder %s101, %s104
      %p110 = scmp.eq.s32.totalorder %s9, 0
      %p111 = por %p109, %p110
      %p112 = scmp.ne.s32.totalorder %s101, %s104
      %p113 = scmp.eq.s32.totalorder %s14, 5
      %p114 = por %p112, %p113
      %p115 = scmp.ne.s32.totalorder %s104, %s105
      %p116 = scmp.eq.s32.totalorder %s14, 0
      %p117 = por %p115, %p116
      %p118 = scmp.ne.s32.totalorder %s104, %s105
      %p119 = scmp.eq.s32.totalorder %s15, 5
      %p120 = por %p118, %p119
      %p122 = scmp.ne.s32.totalorder %s105, %s121
      %p123 = scmp.eq.s32.totalorder %s15, 0
      %p124 = por %p122, %p123
      %p125 = scmp.le.s32.totalorder 1, %s9
      %p126 = scmp.lt.s32.totalorder %s9, 7
      %p127 = pnand %p125, %p126
      %p128 = pneg %p127
      // Predicated region
      $region9: #{tpu_custom_call.1} parent=5 // pred_check
        _
      $region10: #{tpu_custom_call.1} parent=5 // pred_check_branch
        %130 = sbr.rel (%p127) target = $region12
      $region11: #{tpu_custom_call.1} parent=5 // pred_region
        %s131 = ssub.s32 %s9, 1
        // Predicated region
        $region13: #{tpu_custom_call.1} parent=11 // pred_check
          %p132 = pneg %p68
        $region14: #{tpu_custom_call.1} parent=11 // pred_check_branch
          %134 = sbr.rel (%p132) target = $region16
        $region15: #{tpu_custom_call.1} parent=11 // pred_region
          _
        $region16: #{tpu_custom_call.1} parent=11 // pred_fallthru
          _
        // Predicated region
        $region17: #{tpu_custom_call.1} parent=11 // pred_check
          %p135 = pneg %p89
        $region18: #{tpu_custom_call.1} parent=11 // pred_check_branch
          %137 = sbr.rel (%p135) target = $region20
        $region19: #{tpu_custom_call.1} parent=11 // pred_region
          _
        $region20: #{tpu_custom_call.1} parent=11 // pred_fallthru
          _
      $region12: #{tpu_custom_call.1} parent=5 // pred_fallthru
        _
      %p138 = scmp.lt.s32.totalorder %s9, 6
      // Predicated region
      $region21: #{tpu_custom_call.1} parent=5 // pred_check
        %p139 = pneg %p138
      $region22: #{tpu_custom_call.1} parent=5 // pred_check_branch
        %141 = sbr.rel (%p139) target = $region24
      $region23: #{tpu_custom_call.1} parent=5 // pred_region
        // Predicated region
        $region25: #{tpu_custom_call.1} parent=23 // pred_check
          %p142 = pneg %p41
        $region26: #{tpu_custom_call.1} parent=23 // pred_check_branch
          %144 = sbr.rel (%p142) target = $region28
        $region27: #{tpu_custom_call.1} parent=23 // pred_region
          %p145 = scmp.lt.s32.totalorder %s16, 1
          %s146 = scalar_select %p145, %s16, 1
          %s147 = smul.addr %s146, 78
          %s148 = smul.addr %s147, 4
          %s149 = scalar_lea.vmem %s0, %s148
        $region28: #{tpu_custom_call.1} parent=23 // pred_fallthru
          _
      $region24: #{tpu_custom_call.1} parent=5 // pred_fallthru
        _
      %p150 = scmp.le.s32.totalorder 1, %s9
      %p151 = scmp.lt.s32.totalorder %s9, 7
      %p152 = pnand %p150, %p151
      %p153 = pneg %p152
      // Predicated region
      $region29: #{tpu_custom_call.1} parent=5 // pred_check
        _
      $region30: #{tpu_custom_call.1} parent=5 // pred_check_branch
        %155 = sbr.rel (%p152) target = $region32
      $region31: #{tpu_custom_call.1} parent=5 // pred_region
        %s156 = ssub.s32 %s9, 1
        %p157 = scmp.lt.s32.totalorder %s18, 1
        %s158 = scalar_select %p157, %s18, 1
        %s159 = smul.addr %s158, 78
        %s160 = smul.addr %s159, 4
        %s161 = scalar_lea.vmem %s0, %s160
        %p162 = pneg %p47
        %p163 = pneg %p44
        %p164 = pneg %p68
        %p165 = pneg %p65
        %p166 = pneg %p89
        %p167 = pneg %p86
        %p168 = pneg %p117
        %p169 = pneg %p114
        %s170 = sand.u32 %s104, 1
        %s171 = sand.u32 %s104, 1
        %s172 = smul.addr %s171, 96
        %s173 = scalar_lea.vmem [#allocation2], %s172
        %p174 = scmp.lt.s32.totalorder %s18, 1
        %s175 = scalar_select %p174, %s18, 1
        %s176 = smul.addr %s175, 78
        %s177 = smul.addr %s176, 4
        %s178 = scalar_lea.vmem %s0, %s177
        %s179 = smul.u32 8, %s19
        %s180 = ssub.s32 19, %s179
        %p181 = scmp.lt.s32.totalorder %s180, 8
        %s182 = scalar_select %p181, %s180, 8
        %s183 = smul.u32 64, %s182
        %s184 = smul.u32 %s183, 3
        %s185 = smul.u32 %s19, 8
        %v186 = vld [vmem:[%s1] sm:$0xff]
        %v187 = vld [vmem:[%s1 + $0x8] sm:$0x1]
        %s188 = smul.u32 %s185, 3
        %s189 = smul.addr %s188, 4
        %s190 = scalar_lea.vmem %s178, %s189
        %v191 = vld [vmem:[%s190] sm:$0xf]
        %v192 = vld [vmem:[%s190 + $0x4] sm:$0xf]
        %v193 = vld [vmem:[%s190 + $0x8] sm:$0x7]
        %v194 = vld [vmem:[%s190 + $0xc] sm:$0xf]
        %v195 = vld [vmem:[%s190 + $0x10] sm:$0xf]
        %v196 = vld [vmem:[%s190 + $0x14] sm:$0x7]
        %v197 = vld [vmem:[%s190 + $0x18] sm:$0xf]
        %v198 = vld [vmem:[%s190 + $0x1c] sm:$0xf]
        %v199 = vld [vmem:[%s190 + $0x20] sm:$0x7]
        %v200 = vld [vmem:[%s190 + $0x24] sm:$0xf]
        %v201 = vld [vmem:[%s190 + $0x28] sm:$0xf]
        %v202 = vld [vmem:[%s190 + $0x2c] sm:$0x7]
        %v203 = vld [vmem:[%s190 + $0x30] sm:$0xf]
        %v204 = vld [vmem:[%s190 + $0x34] sm:$0xf]
        %v205 = vld [vmem:[%s190 + $0x38] sm:$0x7]
        %v206 = vld [vmem:[%s190 + $0x3c] sm:$0xf]
        %v207 = vld [vmem:[%s190 + $0x40] sm:$0xf]
        %v208 = vld [vmem:[%s190 + $0x44] sm:$0x7]
        %v209 = vld [vmem:[%s190 + $0x48] sm:$0xf]
        %v210 = vld [vmem:[%s190 + $0x4c] sm:$0xf]
        %v211 = vld [vmem:[%s190 + $0x50] sm:$0x7]
        %v212 = vld [vmem:[%s190 + $0x54] sm:$0xf]
        %v213 = vld [vmem:[%s190 + $0x58] sm:$0xf]
        %v214 = vld [vmem:[%s190 + $0x5c] sm:$0x7]
        %v215 = vunpack.c.l.bf16 %v191
        %v216 = vunpack.c.l.bf16 %v192
        %v217 = vunpack.c.l.bf16 %v193
        %v218 = vunpack.c.l.bf16 %v194
        %v219 = vunpack.c.l.bf16 %v195
        %v220 = vunpack.c.l.bf16 %v196
        %v221 = vunpack.c.l.bf16 %v197
        %v222 = vunpack.c.l.bf16 %v198
        %v223 = vunpack.c.l.bf16 %v199
        %v224 = vunpack.c.l.bf16 %v200
        %v225 = vunpack.c.l.bf16 %v201
        %v226 = vunpack.c.l.bf16 %v202
        %v227 = vunpack.c.l.bf16 %v203
        %v228 = vunpack.c.l.bf16 %v204
        %v229 = vunpack.c.l.bf16 %v205
        %v230 = vunpack.c.l.bf16 %v206
        %v231 = vunpack.c.l.bf16 %v207
        %v232 = vunpack.c.l.bf16 %v208
        %v233 = vunpack.c.l.bf16 %v209
        %v234 = vunpack.c.l.bf16 %v210
        %v235 = vunpack.c.l.bf16 %v211
        %v236 = vunpack.c.l.bf16 %v212
        %v237 = vunpack.c.l.bf16 %v213
        %v238 = vunpack.c.l.bf16 %v214
        %v239 = vlaneseq
        %v240 = vshrl.u32 %v239, 7
        %v241 = vsub.s32 0, %v240
        %v242 = vrot.slane %v186, %v241
        %v243 = vmul.f32 %v215, %v242
        %v244 = vmul.f32 %v216, %v242
        %v245 = vmul.f32 %v217, %v242
        %v246 = vmul.f32 %v218, %v242
        %v247 = vmul.f32 %v219, %v242
        %v248 = vmul.f32 %v220, %v242
        %v249 = vmul.f32 %v221, %v242
        %v250 = vmul.f32 %v222, %v242
        %v251 = vmul.f32 %v223, %v242
        %v252 = vmul.f32 %v224, %v242
        %v253 = vmul.f32 %v225, %v242
        %v254 = vmul.f32 %v226, %v242
        %v255 = vmul.f32 %v227, %v242
        %v256 = vmul.f32 %v228, %v242
        %v257 = vmul.f32 %v229, %v242
        %v258 = vmul.f32 %v230, %v242
        %v259 = vmul.f32 %v231, %v242
        %v260 = vmul.f32 %v232, %v242
        %v261 = vmul.f32 %v233, %v242
        %v262 = vmul.f32 %v234, %v242
        %v263 = vmul.f32 %v235, %v242
        %v264 = vmul.f32 %v236, %v242
        %v265 = vmul.f32 %v237, %v242
        %v266 = vmul.f32 %v238, %v242
        %v267 = vadd.f32 %v243, 0.0
        %v268 = vadd.f32 %v244, 0.0
        %v269 = vadd.f32 %v245, 0.0
        %v270 = vadd.f32 %v246, 0.0
        %v271 = vadd.f32 %v247, 0.0
        %v272 = vadd.f32 %v248, 0.0
        %v273 = vadd.f32 %v249, 0.0
        %v274 = vadd.f32 %v250, 0.0
        %v275 = vadd.f32 %v251, 0.0
        %v276 = vadd.f32 %v252, 0.0
        %v277 = vadd.f32 %v253, 0.0
        %v278 = vadd.f32 %v254, 0.0
        %v279 = vadd.f32 %v255, 0.0
        %v280 = vadd.f32 %v256, 0.0
        %v281 = vadd.f32 %v257, 0.0
        %v282 = vadd.f32 %v258, 0.0
        %v283 = vadd.f32 %v259, 0.0
        %v284 = vadd.f32 %v260, 0.0
        %v285 = vadd.f32 %v261, 0.0
        %v286 = vadd.f32 %v262, 0.0
        %v287 = vadd.f32 %v263, 0.0
        %v288 = vadd.f32 %v264, 0.0
        %v289 = vadd.f32 %v265, 0.0
        %v290 = vadd.f32 %v266, 0.0
        %v291 = vlaneseq
        %v292 = vshrl.u32 %v291, 7
        %v293 = vsub.s32 1, %v292
        %v294 = vrot.slane %v186, %v293
        %v295 = vmul.f32 %v215, %v294
        %v296 = vmul.f32 %v216, %v294
        %v297 = vmul.f32 %v217, %v294
        %v298 = vmul.f32 %v218, %v294
        %v299 = vmul.f32 %v219, %v294
        %v300 = vmul.f32 %v220, %v294
        %v301 = vmul.f32 %v221, %v294
        %v302 = vmul.f32 %v222, %v294
        %v303 = vmul.f32 %v223, %v294
        %v304 = vmul.f32 %v224, %v294
        %v305 = vmul.f32 %v225, %v294
        %v306 = vmul.f32 %v226, %v294
        %v307 = vmul.f32 %v227, %v294
        %v308 = vmul.f32 %v228, %v294
        %v309 = vmul.f32 %v229, %v294
        %v310 = vmul.f32 %v230, %v294
        %v311 = vmul.f32 %v231, %v294
        %v312 = vmul.f32 %v232, %v294
        %v313 = vmul.f32 %v233, %v294
        %v314 = vmul.f32 %v234, %v294
        %v315 = vmul.f32 %v235, %v294
        %v316 = vmul.f32 %v236, %v294
        %v317 = vmul.f32 %v237, %v294
        %v318 = vmul.f32 %v238, %v294
        %vm343 = vcmask 1046528
        %v344 = vrot.slane %v295, 1
        %v345 = vrot.slane %v296, 1
        %v346 = vsel %vm343, %v344, %v345
        %v347 = vrot.slane %v297, 1
        %v348 = vsel %vm343, %v345, %v347
        %v349 = vrot.slane %v298, 1
        %v350 = vrot.slane %v299, 1
        %v351 = vsel %vm343, %v349, %v350
        %v352 = vrot.slane %v300, 1
        %v353 = vsel %vm343, %v350, %v352
        %v354 = vrot.slane %v301, 1
        %v355 = vrot.slane %v302, 1
        %v356 = vsel %vm343, %v354, %v355
        %v357 = vrot.slane %v303, 1
        %v358 = vsel %vm343, %v355, %v357
        %v359 = vrot.slane %v304, 1
        %v360 = vrot.slane %v305, 1
        %v361 = vsel %vm343, %v359, %v360
        %v362 = vrot.slane %v306, 1
        %v363 = vsel %vm343, %v360, %v362
        %v364 = vrot.slane %v307, 1
        %v365 = vrot.slane %v308, 1
        %v366 = vsel %vm343, %v364, %v365
        %v367 = vrot.slane %v309, 1
        %v368 = vsel %vm343, %v365, %v367
        %v369 = vrot.slane %v310, 1
        %v370 = vrot.slane %v311, 1
        %v371 = vsel %vm343, %v369, %v370
        %v372 = vrot.slane %v312, 1
        %v373 = vsel %vm343, %v370, %v372
        %v374 = vrot.slane %v313, 1
        %v375 = vrot.slane %v314, 1
        %v376 = vsel %vm343, %v374, %v375
        %v377 = vrot.slane %v315, 1
        %v378 = vsel %vm343, %v375, %v377
        %v379 = vrot.slane %v316, 1
        %v380 = vrot.slane %v317, 1
        %v381 = vsel %vm343, %v379, %v380
        %v382 = vrot.slane %v318, 1
        %v383 = vsel %vm343, %v380, %v382
        %v408 = vadd.f32 %v267, %v346
        %v409 = vadd.f32 %v268, %v348
        %v410 = vadd.f32 %v269, %v347
        %v411 = vadd.f32 %v270, %v351
        %v412 = vadd.f32 %v271, %v353
        %v413 = vadd.f32 %v272, %v352
        %v414 = vadd.f32 %v273, %v356
        %v415 = vadd.f32 %v274, %v358
        %v416 = vadd.f32 %v275, %v357
        %v417 = vadd.f32 %v276, %v361
        %v418 = vadd.f32 %v277, %v363
        %v419 = vadd.f32 %v278, %v362
        %v420 = vadd.f32 %v279, %v366
        %v421 = vadd.f32 %v280, %v368
        %v422 = vadd.f32 %v281, %v367
        %v423 = vadd.f32 %v282, %v371
        %v424 = vadd.f32 %v283, %v373
        %v425 = vadd.f32 %v284, %v372
        %v426 = vadd.f32 %v285, %v376
        %v427 = vadd.f32 %v286, %v378
        %v428 = vadd.f32 %v287, %v377
        %v429 = vadd.f32 %v288, %v381
        %v430 = vadd.f32 %v289, %v383
        %v431 = vadd.f32 %v290, %v382
        %v432 = vld [vmem:[%s190] sm:$0xe]
        %v433 = vld [vmem:[%s190 + $0x8] sm:$0xf]
        %v434 = vld [vmem:[%s190 + $0xc] sm:$0xe]
        %v435 = vld [vmem:[%s190 + $0x14] sm:$0xf]
        %v436 = vld [vmem:[%s190 + $0x18] sm:$0xe]
        %v437 = vld [vmem:[%s190 + $0x20] sm:$0xf]
        %v438 = vld [vmem:[%s190 + $0x24] sm:$0xe]
        %v439 = vld [vmem:[%s190 + $0x2c] sm:$0xf]
        %v440 = vld [vmem:[%s190 + $0x30] sm:$0xe]
        %v441 = vld [vmem:[%s190 + $0x38] sm:$0xf]
        %v442 = vld [vmem:[%s190 + $0x3c] sm:$0xe]
        %v443 = vld [vmem:[%s190 + $0x44] sm:$0xf]
        %v444 = vld [vmem:[%s190 + $0x48] sm:$0xe]
        %v445 = vld [vmem:[%s190 + $0x50] sm:$0xf]
        %v446 = vld [vmem:[%s190 + $0x54] sm:$0xe]
        %v447 = vld [vmem:[%s190 + $0x5c] sm:$0xf]
        %v448 = vunpack.c.l.bf16 %v432
        %v449 = vunpack.c.l.bf16 %v433
        %v450 = vunpack.c.l.bf16 %v434
        %v451 = vunpack.c.l.bf16 %v435
        %v452 = vunpack.c.l.bf16 %v436
        %v453 = vunpack.c.l.bf16 %v437
        %v454 = vunpack.c.l.bf16 %v438
        %v455 = vunpack.c.l.bf16 %v439
        %v456 = vunpack.c.l.bf16 %v440
        %v457 = vunpack.c.l.bf16 %v441
        %v458 = vunpack.c.l.bf16 %v442
        %v459 = vunpack.c.l.bf16 %v443
        %v460 = vunpack.c.l.bf16 %v444
        %v461 = vunpack.c.l.bf16 %v445
        %v462 = vunpack.c.l.bf16 %v446
        %v463 = vunpack.c.l.bf16 %v447
        %v464 = vlaneseq
        %v465 = vshrl.u32 %v464, 7
        %v466 = vsub.s32 2, %v465
        %v467 = vrot.slane %v186, %v466
        %v468 = vmul.f32 %v448, %v467
        %v469 = vmul.f32 %v216, %v467
        %v470 = vmul.f32 %v449, %v467
        %v471 = vmul.f32 %v450, %v467
        %v472 = vmul.f32 %v219, %v467
        %v473 = vmul.f32 %v451, %v467
        %v474 = vmul.f32 %v452, %v467
        %v475 = vmul.f32 %v222, %v467
        %v476 = vmul.f32 %v453, %v467
        %v477 = vmul.f32 %v454, %v467
        %v478 = vmul.f32 %v225, %v467
        %v479 = vmul.f32 %v455, %v467
        %v480 = vmul.f32 %v456, %v467
        %v481 = vmul.f32 %v228, %v467
        %v482 = vmul.f32 %v457, %v467
        %v483 = vmul.f32 %v458, %v467
        %v484 = vmul.f32 %v231, %v467
        %v485 = vmul.f32 %v459, %v467
        %v486 = vmul.f32 %v460, %v467
        %v487 = vmul.f32 %v234, %v467
        %v488 = vmul.f32 %v461, %v467
        %v489 = vmul.f32 %v462, %v467
        %v490 = vmul.f32 %v237, %v467
        %v491 = vmul.f32 %v463, %v467
        %vm516 = vcmask 1045504
        %v517 = vrot.slane %v468, 2
        %v518 = vrot.slane %v469, 2
        %v519 = vsel %vm516, %v517, %v518
        %v520 = vrot.slane %v470, 2
        %v521 = vsel %vm516, %v518, %v520
        %v522 = vrot.slane %v471, 2
        %v523 = vrot.slane %v472, 2
        %v524 = vsel %vm516, %v522, %v523
        %v525 = vrot.slane %v473, 2
        %v526 = vsel %vm516, %v523, %v525
        %v527 = vrot.slane %v474, 2
        %v528 = vrot.slane %v475, 2
        %v529 = vsel %vm516, %v527, %v528
        %v530 = vrot.slane %v476, 2
        %v531 = vsel %vm516, %v528, %v530
        %v532 = vrot.slane %v477, 2
        %v533 = vrot.slane %v478, 2
        %v534 = vsel %vm516, %v532, %v533
        %v535 = vrot.slane %v479, 2
        %v536 = vsel %vm516, %v533, %v535
        %v537 = vrot.slane %v480, 2
        %v538 = vrot.slane %v481, 2
        %v539 = vsel %vm516, %v537, %v538
        %v540 = vrot.slane %v482, 2
        %v541 = vsel %vm516, %v538, %v540
        %v542 = vrot.slane %v483, 2
        %v543 = vrot.slane %v484, 2
        %v544 = vsel %vm516, %v542, %v543
        %v545 = vrot.slane %v485, 2
        %v546 = vsel %vm516, %v543, %v545
        %v547 = vrot.slane %v486, 2
        %v548 = vrot.slane %v487, 2
        %v549 = vsel %vm516, %v547, %v548
        %v550 = vrot.slane %v488, 2
        %v551 = vsel %vm516, %v548, %v550
        %v552 = vrot.slane %v489, 2
        %v553 = vrot.slane %v490, 2
        %v554 = vsel %vm516, %v552, %v553
        %v555 = vrot.slane %v491, 2
        %v556 = vsel %vm516, %v553, %v555
        %v581 = vadd.f32 %v408, %v519
        %v582 = vadd.f32 %v409, %v521
        %v583 = vadd.f32 %v410, %v520
        %v584 = vadd.f32 %v411, %v524
        %v585 = vadd.f32 %v412, %v526
        %v586 = vadd.f32 %v413, %v525
        %v587 = vadd.f32 %v414, %v529
        %v588 = vadd.f32 %v415, %v531
        %v589 = vadd.f32 %v416, %v530
        %v590 = vadd.f32 %v417, %v534
        %v591 = vadd.f32 %v418, %v536
        %v592 = vadd.f32 %v419, %v535
        %v593 = vadd.f32 %v420, %v539
        %v594 = vadd.f32 %v421, %v541
        %v595 = vadd.f32 %v422, %v540
        %v596 = vadd.f32 %v423, %v544
        %v597 = vadd.f32 %v424, %v546
        %v598 = vadd.f32 %v425, %v545
        %v599 = vadd.f32 %v426, %v549
        %v600 = vadd.f32 %v427, %v551
        %v601 = vadd.f32 %v428, %v550
        %v602 = vadd.f32 %v429, %v554
        %v603 = vadd.f32 %v430, %v556
        %v604 = vadd.f32 %v431, %v555
        %s605 = sadd.s32 %s185, 1
        %s606 = smul.u32 %s605, 3
        %s607 = smul.addr %s606, 4
        %s608 = scalar_lea.vmem %s178, %s607
        %v609 = vld [vmem:[%s608] sm:$0xf]
        %v610 = vld [vmem:[%s608 + $0x4] sm:$0xf]
        %v611 = vld [vmem:[%s608 + $0x8] sm:$0x7]
        %v612 = vld [vmem:[%s608 + $0xc] sm:$0xf]
        %v613 = vld [vmem:[%s608 + $0x10] sm:$0xf]
        %v614 = vld [vmem:[%s608 + $0x14] sm:$0x7]
        %v615 = vld [vmem:[%s608 + $0x18] sm:$0xf]
        %v616 = vld [vmem:[%s608 + $0x1c] sm:$0xf]
        %v617 = vld [vmem:[%s608 + $0x20] sm:$0x7]
        %v618 = vld [vmem:[%s608 + $0x24] sm:$0xf]
        %v619 = vld [vmem:[%s608 + $0x28] sm:$0xf]
        %v620 = vld [vmem:[%s608 + $0x2c] sm:$0x7]
        %v621 = vld [vmem:[%s608 + $0x30] sm:$0xf]
        %v622 = vld [vmem:[%s608 + $0x34] sm:$0xf]
        %v623 = vld [vmem:[%s608 + $0x38] sm:$0x7]
        %v624 = vld [vmem:[%s608 + $0x3c] sm:$0xf]
        %v625 = vld [vmem:[%s608 + $0x40] sm:$0xf]
        %v626 = vld [vmem:[%s608 + $0x44] sm:$0x7]
        %v627 = vld [vmem:[%s608 + $0x48] sm:$0xf]
        %v628 = vld [vmem:[%s608 + $0x4c] sm:$0xf]
        %v629 = vld [vmem:[%s608 + $0x50] sm:$0x7]
        %v630 = vld [vmem:[%s608 + $0x54] sm:$0xf]
        %v631 = vld [vmem:[%s608 + $0x58] sm:$0xf]
        %v632 = vld [vmem:[%s608 + $0x5c] sm:$0x7]
        %v633 = vunpack.c.l.bf16 %v609
        %v634 = vunpack.c.l.bf16 %v610
        %v635 = vunpack.c.l.bf16 %v611
        %v636 = vunpack.c.l.bf16 %v612
        %v637 = vunpack.c.l.bf16 %v613
        %v638 = vunpack.c.l.bf16 %v614
        %v639 = vunpack.c.l.bf16 %v615
        %v640 = vunpack.c.l.bf16 %v616
        %v641 = vunpack.c.l.bf16 %v617
        %v642 = vunpack.c.l.bf16 %v618
        %v643 = vunpack.c.l.bf16 %v619
        %v644 = vunpack.c.l.bf16 %v620
        %v645 = vunpack.c.l.bf16 %v621
        %v646 = vunpack.c.l.bf16 %v622
        %v647 = vunpack.c.l.bf16 %v623
        %v648 = vunpack.c.l.bf16 %v624
        %v649 = vunpack.c.l.bf16 %v625
        %v650 = vunpack.c.l.bf16 %v626
        %v651 = vunpack.c.l.bf16 %v627
        %v652 = vunpack.c.l.bf16 %v628
        %v653 = vunpack.c.l.bf16 %v629
        %v654 = vunpack.c.l.bf16 %v630
        %v655 = vunpack.c.l.bf16 %v631
        %v656 = vunpack.c.l.bf16 %v632
        %v657 = vlaneseq
        %v658 = vshrl.u32 %v657, 7
        %v659 = vsub.s32 3, %v658
        %v660 = vrot.slane %v186, %v659
        %v661 = vmul.f32 %v633, %v660
        %v662 = vmul.f32 %v634, %v660
        %v663 = vmul.f32 %v635, %v660
        %v664 = vmul.f32 %v636, %v660
        %v665 = vmul.f32 %v637, %v660
        %v666 = vmul.f32 %v638, %v660
        %v667 = vmul.f32 %v639, %v660
        %v668 = vmul.f32 %v640, %v660
        %v669 = vmul.f32 %v641, %v660
        %v670 = vmul.f32 %v642, %v660
        %v671 = vmul.f32 %v643, %v660
        %v672 = vmul.f32 %v644, %v660
        %v673 = vmul.f32 %v645, %v660
        %v674 = vmul.f32 %v646, %v660
        %v675 = vmul.f32 %v647, %v660
        %v676 = vmul.f32 %v648, %v660
        %v677 = vmul.f32 %v649, %v660
        %v678 = vmul.f32 %v650, %v660
        %v679 = vmul.f32 %v651, %v660
        %v680 = vmul.f32 %v652, %v660
        %v681 = vmul.f32 %v653, %v660
        %v682 = vmul.f32 %v654, %v660
        %v683 = vmul.f32 %v655, %v660
        %v684 = vmul.f32 %v656, %v660
        %v685 = vadd.f32 %v581, %v661
        %v686 = vadd.f32 %v582, %v662
        %v687 = vadd.f32 %v583, %v663
        %v688 = vadd.f32 %v584, %v664
        %v689 = vadd.f32 %v585, %v665
        %v690 = vadd.f32 %v586, %v666
        %v691 = vadd.f32 %v587, %v667
        %v692 = vadd.f32 %v588, %v668
        %v693 = vadd.f32 %v589, %v669
        %v694 = vadd.f32 %v590, %v670
        %v695 = vadd.f32 %v591, %v671
        %v696 = vadd.f32 %v592, %v672
        %v697 = vadd.f32 %v593, %v673
        %v698 = vadd.f32 %v594, %v674
        %v699 = vadd.f32 %v595, %v675
        %v700 = vadd.f32 %v596, %v676
        %v701 = vadd.f32 %v597, %v677
        %v702 = vadd.f32 %v598, %v678
        %v703 = vadd.f32 %v599, %v679
        %v704 = vadd.f32 %v600, %v680
        %v705 = vadd.f32 %v601, %v681
        %v706 = vadd.f32 %v602, %v682
        %v707 = vadd.f32 %v603, %v683
        %v708 = vadd.f32 %v604, %v684
        %v709 = vlaneseq
        %v710 = vshrl.u32 %v709, 7
        %v711 = vsub.s32 4, %v710
        %v712 = vrot.slane %v186, %v711
        %v713 = vmul.f32 %v633, %v712
        %v714 = vmul.f32 %v634, %v712
        %v715 = vmul.f32 %v635, %v712
        %v716 = vmul.f32 %v636, %v712
        %v717 = vmul.f32 %v637, %v712
        %v718 = vmul.f32 %v638, %v712
        %v719 = vmul.f32 %v639, %v712
        %v720 = vmul.f32 %v640, %v712
        %v721 = vmul.f32 %v641, %v712
        %v722 = vmul.f32 %v642, %v712
        %v723 = vmul.f32 %v643, %v712
        %v724 = vmul.f32 %v644, %v712
        %v725 = vmul.f32 %v645, %v712
        %v726 = vmul.f32 %v646, %v712
        %v727 = vmul.f32 %v647, %v712
        %v728 = vmul.f32 %v648, %v712
        %v729 = vmul.f32 %v649, %v712
        %v730 = vmul.f32 %v650, %v712
        %v731 = vmul.f32 %v651, %v712
        %v732 = vmul.f32 %v652, %v712
        %v733 = vmul.f32 %v653, %v712
        %v734 = vmul.f32 %v654, %v712
        %v735 = vmul.f32 %v655, %v712
        %v736 = vmul.f32 %v656, %v712
        %v761 = vrot.slane %v713, 1
        %v762 = vrot.slane %v714, 1
        %v763 = vsel %vm343, %v761, %v762
        %v764 = vrot.slane %v715, 1
        %v765 = vsel %vm343, %v762, %v764
        %v766 = vrot.slane %v716, 1
        %v767 = vrot.slane %v717, 1
        %v768 = vsel %vm343, %v766, %v767
        %v769 = vrot.slane %v718, 1
        %v770 = vsel %vm343, %v767, %v769
        %v771 = vrot.slane %v719, 1
        %v772 = vrot.slane %v720, 1
        %v773 = vsel %vm343, %v771, %v772
        %v774 = vrot.slane %v721, 1
        %v775 = vsel %vm343, %v772, %v774
        %v776 = vrot.slane %v722, 1
        %v777 = vrot.slane %v723, 1
        %v778 = vsel %vm343, %v776, %v777
        %v779 = vrot.slane %v724, 1
        %v780 = vsel %vm343, %v777, %v779
        %v781 = vrot.slane %v725, 1
        %v782 = vrot.slane %v726, 1
        %v783 = vsel %vm343, %v781, %v782
        %v784 = vrot.slane %v727, 1
        %v785 = vsel %vm343, %v782, %v784
        %v786 = vrot.slane %v728, 1
        %v787 = vrot.slane %v729, 1
        %v788 = vsel %vm343, %v786, %v787
        %v789 = vrot.slane %v730, 1
        %v790 = vsel %vm343, %v787, %v789
        %v791 = vrot.slane %v731, 1
        %v792 = vrot.slane %v732, 1
        %v793 = vsel %vm343, %v791, %v792
        %v794 = vrot.slane %v733, 1
        %v795 = vsel %vm343, %v792, %v794
        %v796 = vrot.slane %v734, 1
        %v797 = vrot.slane %v735, 1
        %v798 = vsel %vm343, %v796, %v797
        %v799 = vrot.slane %v736, 1
        %v800 = vsel %vm343, %v797, %v799
        %v825 = vadd.f32 %v685, %v763
        %v826 = vadd.f32 %v686, %v765
        %v827 = vadd.f32 %v687, %v764
        %v828 = vadd.f32 %v688, %v768
        %v829 = vadd.f32 %v689, %v770
        %v830 = vadd.f32 %v690, %v769
        %v831 = vadd.f32 %v691, %v773
        %v832 = vadd.f32 %v692, %v775
        %v833 = vadd.f32 %v693, %v774
        %v834 = vadd.f32 %v694, %v778
        %v835 = vadd.f32 %v695, %v780
        %v836 = vadd.f32 %v696, %v779
        %v837 = vadd.f32 %v697, %v783
        %v838 = vadd.f32 %v698, %v785
        %v839 = vadd.f32 %v699, %v784
        %v840 = vadd.f32 %v700, %v788
        %v841 = vadd.f32 %v701, %v790
        %v842 = vadd.f32 %v702, %v789
        %v843 = vadd.f32 %v703, %v793
        %v844 = vadd.f32 %v704, %v795
        %v845 = vadd.f32 %v705, %v794
        %v846 = vadd.f32 %v706, %v798
        %v847 = vadd.f32 %v707, %v800
        %v848 = vadd.f32 %v708, %v799
        %v849 = vld [vmem:[%s608] sm:$0xe]
        %v850 = vld [vmem:[%s608 + $0x8] sm:$0xf]
        %v851 = vld [vmem:[%s608 + $0xc] sm:$0xe]
        %v852 = vld [vmem:[%s608 + $0x14] sm:$0xf]
        %v853 = vld [vmem:[%s608 + $0x18] sm:$0xe]
        %v854 = vld [vmem:[%s608 + $0x20] sm:$0xf]
        %v855 = vld [vmem:[%s608 + $0x24] sm:$0xe]
        %v856 = vld [vmem:[%s608 + $0x2c] sm:$0xf]
        %v857 = vld [vmem:[%s608 + $0x30] sm:$0xe]
        %v858 = vld [vmem:[%s608 + $0x38] sm:$0xf]
        %v859 = vld [vmem:[%s608 + $0x3c] sm:$0xe]
        %v860 = vld [vmem:[%s608 + $0x44] sm:$0xf]
        %v861 = vld [vmem:[%s608 + $0x48] sm:$0xe]
        %v862 = vld [vmem:[%s608 + $0x50] sm:$0xf]
        %v863 = vld [vmem:[%s608 + $0x54] sm:$0xe]
        %v864 = vld [vmem:[%s608 + $0x5c] sm:$0xf]
        %v865 = vunpack.c.l.bf16 %v849
        %v866 = vunpack.c.l.bf16 %v850
        %v867 = vunpack.c.l.bf16 %v851
        %v868 = vunpack.c.l.bf16 %v852
        %v869 = vunpack.c.l.bf16 %v853
        %v870 = vunpack.c.l.bf16 %v854
        %v871 = vunpack.c.l.bf16 %v855
        %v872 = vunpack.c.l.bf16 %v856
        %v873 = vunpack.c.l.bf16 %v857
        %v874 = vunpack.c.l.bf16 %v858
        %v875 = vunpack.c.l.bf16 %v859
        %v876 = vunpack.c.l.bf16 %v860
        %v877 = vunpack.c.l.bf16 %v861
        %v878 = vunpack.c.l.bf16 %v862
        %v879 = vunpack.c.l.bf16 %v863
        %v880 = vunpack.c.l.bf16 %v864
        %v881 = vlaneseq
        %v882 = vshrl.u32 %v881, 7
        %v883 = vsub.s32 5, %v882
        %v884 = vrot.slane %v186, %v883
        %v885 = vmul.f32 %v865, %v884
        %v886 = vmul.f32 %v634, %v884
        %v887 = vmul.f32 %v866, %v884
        %v888 = vmul.f32 %v867, %v884
        %v889 = vmul.f32 %v637, %v884
        %v890 = vmul.f32 %v868, %v884
        %v891 = vmul.f32 %v869, %v884
        %v892 = vmul.f32 %v640, %v884
        %v893 = vmul.f32 %v870, %v884
        %v894 = vmul.f32 %v871, %v884
        %v895 = vmul.f32 %v643, %v884
        %v896 = vmul.f32 %v872, %v884
        %v897 = vmul.f32 %v873, %v884
        %v898 = vmul.f32 %v646, %v884
        %v899 = vmul.f32 %v874, %v884
        %v900 = vmul.f32 %v875, %v884
        %v901 = vmul.f32 %v649, %v884
        %v902 = vmul.f32 %v876, %v884
        %v903 = vmul.f32 %v877, %v884
        %v904 = vmul.f32 %v652, %v884
        %v905 = vmul.f32 %v878, %v884
        %v906 = vmul.f32 %v879, %v884
        %v907 = vmul.f32 %v655, %v884
        %v908 = vmul.f32 %v880, %v884
        %v933 = vrot.slane %v885, 2
        %v934 = vrot.slane %v886, 2
        %v935 = vsel %vm516, %v933, %v934
        %v936 = vrot.slane %v887, 2
        %v937 = vsel %vm516, %v934, %v936
        %v938 = vrot.slane %v888, 2
        %v939 = vrot.slane %v889, 2
        %v940 = vsel %vm516, %v938, %v939
        %v941 = vrot.slane %v890, 2
        %v942 = vsel %vm516, %v939, %v941
        %v943 = vrot.slane %v891, 2
        %v944 = vrot.slane %v892, 2
        %v945 = vsel %vm516, %v943, %v944
        %v946 = vrot.slane %v893, 2
        %v947 = vsel %vm516, %v944, %v946
        %v948 = vrot.slane %v894, 2
        %v949 = vrot.slane %v895, 2
        %v950 = vsel %vm516, %v948, %v949
        %v951 = vrot.slane %v896, 2
        %v952 = vsel %vm516, %v949, %v951
        %v953 = vrot.slane %v897, 2
        %v954 = vrot.slane %v898, 2
        %v955 = vsel %vm516, %v953, %v954
        %v956 = vrot.slane %v899, 2
        %v957 = vsel %vm516, %v954, %v956
        %v958 = vrot.slane %v900, 2
        %v959 = vrot.slane %v901, 2
        %v960 = vsel %vm516, %v958, %v959
        %v961 = vrot.slane %v902, 2
        %v962 = vsel %vm516, %v959, %v961
        %v963 = vrot.slane %v903, 2
        %v964 = vrot.slane %v904, 2
        %v965 = vsel %vm516, %v963, %v964
        %v966 = vrot.slane %v905, 2
        %v967 = vsel %vm516, %v964, %v966
        %v968 = vrot.slane %v906, 2
        %v969 = vrot.slane %v907, 2
        %v970 = vsel %vm516, %v968, %v969
        %v971 = vrot.slane %v908, 2
        %v972 = vsel %vm516, %v969, %v971
        %v997 = vadd.f32 %v825, %v935
        %v998 = vadd.f32 %v826, %v937
        %v999 = vadd.f32 %v827, %v936
        %v1000 = vadd.f32 %v828, %v940
        %v1001 = vadd.f32 %v829, %v942
        %v1002 = vadd.f32 %v830, %v941
        %v1003 = vadd.f32 %v831, %v945
        %v1004 = vadd.f32 %v832, %v947
        %v1005 = vadd.f32 %v833, %v946
        %v1006 = vadd.f32 %v834, %v950
        %v1007 = vadd.f32 %v835, %v952
        %v1008 = vadd.f32 %v836, %v951
        %v1009 = vadd.f32 %v837, %v955
        %v1010 = vadd.f32 %v838, %v957
        %v1011 = vadd.f32 %v839, %v956
        %v1012 = vadd.f32 %v840, %v960
        %v1013 = vadd.f32 %v841, %v962
        %v1014 = vadd.f32 %v842, %v961
        %v1015 = vadd.f32 %v843, %v965
        %v1016 = vadd.f32 %v844, %v967
        %v1017 = vadd.f32 %v845, %v966
        %v1018 = vadd.f32 %v846, %v970
        %v1019 = vadd.f32 %v847, %v972
        %v1020 = vadd.f32 %v848, %v971
        %s1021 = sadd.s32 %s185, 2
        %s1022 = smul.u32 %s1021, 3
        %s1023 = smul.addr %s1022, 4
        %s1024 = scalar_lea.vmem %s178, %s1023
        %v1025 = vld [vmem:[%s1024] sm:$0xf]
        %v1026 = vld [vmem:[%s1024 + $0x4] sm:$0xf]
        %v1027 = vld [vmem:[%s1024 + $0x8] sm:$0x7]
        %v1028 = vld [vmem:[%s1024 + $0xc] sm:$0xf]
        %v1029 = vld [vmem:[%s1024 + $0x10] sm:$0xf]
        %v1030 = vld [vmem:[%s1024 + $0x14] sm:$0x7]
        %v1031 = vld [vmem:[%s1024 + $0x18] sm:$0xf]
        %v1032 = vld [vmem:[%s1024 + $0x1c] sm:$0xf]
        %v1033 = vld [vmem:[%s1024 + $0x20] sm:$0x7]
        %v1034 = vld [vmem:[%s1024 + $0x24] sm:$0xf]
        %v1035 = vld [vmem:[%s1024 + $0x28] sm:$0xf]
        %v1036 = vld [vmem:[%s1024 + $0x2c] sm:$0x7]
        %v1037 = vld [vmem:[%s1024 + $0x30] sm:$0xf]
        %v1038 = vld [vmem:[%s1024 + $0x34] sm:$0xf]
        %v1039 = vld [vmem:[%s1024 + $0x38] sm:$0x7]
        %v1040 = vld [vmem:[%s1024 + $0x3c] sm:$0xf]
        %v1041 = vld [vmem:[%s1024 + $0x40] sm:$0xf]
        %v1042 = vld [vmem:[%s1024 + $0x44] sm:$0x7]
        %v1043 = vld [vmem:[%s1024 + $0x48] sm:$0xf]
        %v1044 = vld [vmem:[%s1024 + $0x4c] sm:$0xf]
        %v1045 = vld [vmem:[%s1024 + $0x50] sm:$0x7]
        %v1046 = vld [vmem:[%s1024 + $0x54] sm:$0xf]
        %v1047 = vld [vmem:[%s1024 + $0x58] sm:$0xf]
        %v1048 = vld [vmem:[%s1024 + $0x5c] sm:$0x7]
        %v1049 = vunpack.c.l.bf16 %v1025
        %v1050 = vunpack.c.l.bf16 %v1026
        %v1051 = vunpack.c.l.bf16 %v1027
        %v1052 = vunpack.c.l.bf16 %v1028
        %v1053 = vunpack.c.l.bf16 %v1029
        %v1054 = vunpack.c.l.bf16 %v1030
        %v1055 = vunpack.c.l.bf16 %v1031
        %v1056 = vunpack.c.l.bf16 %v1032
        %v1057 = vunpack.c.l.bf16 %v1033
        %v1058 = vunpack.c.l.bf16 %v1034
        %v1059 = vunpack.c.l.bf16 %v1035
        %v1060 = vunpack.c.l.bf16 %v1036
        %v1061 = vunpack.c.l.bf16 %v1037
        %v1062 = vunpack.c.l.bf16 %v1038
        %v1063 = vunpack.c.l.bf16 %v1039
        %v1064 = vunpack.c.l.bf16 %v1040
        %v1065 = vunpack.c.l.bf16 %v1041
        %v1066 = vunpack.c.l.bf16 %v1042
        %v1067 = vunpack.c.l.bf16 %v1043
        %v1068 = vunpack.c.l.bf16 %v1044
        %v1069 = vunpack.c.l.bf16 %v1045
        %v1070 = vunpack.c.l.bf16 %v1046
        %v1071 = vunpack.c.l.bf16 %v1047
        %v1072 = vunpack.c.l.bf16 %v1048
        %v1073 = vlaneseq
        %v1074 = vshrl.u32 %v1073, 7
        %v1075 = vsub.s32 6, %v1074
        %v1076 = vrot.slane %v186, %v1075
        %v1077 = vmul.f32 %v1049, %v1076
        %v1078 = vmul.f32 %v1050, %v1076
        %v1079 = vmul.f32 %v1051, %v1076
        %v1080 = vmul.f32 %v1052, %v1076
        %v1081 = vmul.f32 %v1053, %v1076
        %v1082 = vmul.f32 %v1054, %v1076
        %v1083 = vmul.f32 %v1055, %v1076
        %v1084 = vmul.f32 %v1056, %v1076
        %v1085 = vmul.f32 %v1057, %v1076
        %v1086 = vmul.f32 %v1058, %v1076
        %v1087 = vmul.f32 %v1059, %v1076
        %v1088 = vmul.f32 %v1060, %v1076
        %v1089 = vmul.f32 %v1061, %v1076
        %v1090 = vmul.f32 %v1062, %v1076
        %v1091 = vmul.f32 %v1063, %v1076
        %v1092 = vmul.f32 %v1064, %v1076
        %v1093 = vmul.f32 %v1065, %v1076
        %v1094 = vmul.f32 %v1066, %v1076
        %v1095 = vmul.f32 %v1067, %v1076
        %v1096 = vmul.f32 %v1068, %v1076
        %v1097 = vmul.f32 %v1069, %v1076
        %v1098 = vmul.f32 %v1070, %v1076
        %v1099 = vmul.f32 %v1071, %v1076
        %v1100 = vmul.f32 %v1072, %v1076
        %v1101 = vadd.f32 %v997, %v1077
        %v1102 = vadd.f32 %v998, %v1078
        %v1103 = vadd.f32 %v999, %v1079
        %v1104 = vadd.f32 %v1000, %v1080
        %v1105 = vadd.f32 %v1001, %v1081
        %v1106 = vadd.f32 %v1002, %v1082
        %v1107 = vadd.f32 %v1003, %v1083
        %v1108 = vadd.f32 %v1004, %v1084
        %v1109 = vadd.f32 %v1005, %v1085
        %v1110 = vadd.f32 %v1006, %v1086
        %v1111 = vadd.f32 %v1007, %v1087
        %v1112 = vadd.f32 %v1008, %v1088
        %v1113 = vadd.f32 %v1009, %v1089
        %v1114 = vadd.f32 %v1010, %v1090
        %v1115 = vadd.f32 %v1011, %v1091
        %v1116 = vadd.f32 %v1012, %v1092
        %v1117 = vadd.f32 %v1013, %v1093
        %v1118 = vadd.f32 %v1014, %v1094
        %v1119 = vadd.f32 %v1015, %v1095
        %v1120 = vadd.f32 %v1016, %v1096
        %v1121 = vadd.f32 %v1017, %v1097
        %v1122 = vadd.f32 %v1018, %v1098
        %v1123 = vadd.f32 %v1019, %v1099
        %v1124 = vadd.f32 %v1020, %v1100
        %v1125 = vlaneseq
        %v1126 = vshrl.u32 %v1125, 7
        %v1127 = vsub.s32 7, %v1126
        %v1128 = vrot.slane %v186, %v1127
        %v1129 = vmul.f32 %v1049, %v1128
        %v1130 = vmul.f32 %v1050, %v1128
        %v1131 = vmul.f32 %v1051, %v1128
        %v1132 = vmul.f32 %v1052, %v1128
        %v1133 = vmul.f32 %v1053, %v1128
        %v1134 = vmul.f32 %v1054, %v1128
        %v1135 = vmul.f32 %v1055, %v1128
        %v1136 = vmul.f32 %v1056, %v1128
        %v1137 = vmul.f32 %v1057, %v1128
        %v1138 = vmul.f32 %v1058, %v1128
        %v1139 = vmul.f32 %v1059, %v1128
        %v1140 = vmul.f32 %v1060, %v1128
        %v1141 = vmul.f32 %v1061, %v1128
        %v1142 = vmul.f32 %v1062, %v1128
        %v1143 = vmul.f32 %v1063, %v1128
        %v1144 = vmul.f32 %v1064, %v1128
        %v1145 = vmul.f32 %v1065, %v1128
        %v1146 = vmul.f32 %v1066, %v1128
        %v1147 = vmul.f32 %v1067, %v1128
        %v1148 = vmul.f32 %v1068, %v1128
        %v1149 = vmul.f32 %v1069, %v1128
        %v1150 = vmul.f32 %v1070, %v1128
        %v1151 = vmul.f32 %v1071, %v1128
        %v1152 = vmul.f32 %v1072, %v1128
        %v1177 = vrot.slane %v1129, 1
        %v1178 = vrot.slane %v1130, 1
        %v1179 = vsel %vm343, %v1177, %v1178
        %v1180 = vrot.slane %v1131, 1
        %v1181 = vsel %vm343, %v1178, %v1180
        %v1182 = vrot.slane %v1132, 1
        %v1183 = vrot.slane %v1133, 1
        %v1184 = vsel %vm343, %v1182, %v1183
        %v1185 = vrot.slane %v1134, 1
        %v1186 = vsel %vm343, %v1183, %v1185
        %v1187 = vrot.slane %v1135, 1
        %v1188 = vrot.slane %v1136, 1
        %v1189 = vsel %vm343, %v1187, %v1188
        %v1190 = vrot.slane %v1137, 1
        %v1191 = vsel %vm343, %v1188, %v1190
        %v1192 = vrot.slane %v1138, 1
        %v1193 = vrot.slane %v1139, 1
        %v1194 = vsel %vm343, %v1192, %v1193
        %v1195 = vrot.slane %v1140, 1
        %v1196 = vsel %vm343, %v1193, %v1195
        %v1197 = vrot.slane %v1141, 1
        %v1198 = vrot.slane %v1142, 1
        %v1199 = vsel %vm343, %v1197, %v1198
        %v1200 = vrot.slane %v1143, 1
        %v1201 = vsel %vm343, %v1198, %v1200
        %v1202 = vrot.slane %v1144, 1
        %v1203 = vrot.slane %v1145, 1
        %v1204 = vsel %vm343, %v1202, %v1203
        %v1205 = vrot.slane %v1146, 1
        %v1206 = vsel %vm343, %v1203, %v1205
        %v1207 = vrot.slane %v1147, 1
        %v1208 = vrot.slane %v1148, 1
        %v1209 = vsel %vm343, %v1207, %v1208
        %v1210 = vrot.slane %v1149, 1
        %v1211 = vsel %vm343, %v1208, %v1210
        %v1212 = vrot.slane %v1150, 1
        %v1213 = vrot.slane %v1151, 1
        %v1214 = vsel %vm343, %v1212, %v1213
        %v1215 = vrot.slane %v1152, 1
        %v1216 = vsel %vm343, %v1213, %v1215
        %v1241 = vadd.f32 %v1101, %v1179
        %v1242 = vadd.f32 %v1102, %v1181
        %v1243 = vadd.f32 %v1103, %v1180
        %v1244 = vadd.f32 %v1104, %v1184
        %v1245 = vadd.f32 %v1105, %v1186
        %v1246 = vadd.f32 %v1106, %v1185
        %v1247 = vadd.f32 %v1107, %v1189
        %v1248 = vadd.f32 %v1108, %v1191
        %v1249 = vadd.f32 %v1109, %v1190
        %v1250 = vadd.f32 %v1110, %v1194
        %v1251 = vadd.f32 %v1111, %v1196
        %v1252 = vadd.f32 %v1112, %v1195
        %v1253 = vadd.f32 %v1113, %v1199
        %v1254 = vadd.f32 %v1114, %v1201
        %v1255 = vadd.f32 %v1115, %v1200
        %v1256 = vadd.f32 %v1116, %v1204
        %v1257 = vadd.f32 %v1117, %v1206
        %v1258 = vadd.f32 %v1118, %v1205
        %v1259 = vadd.f32 %v1119, %v1209
        %v1260 = vadd.f32 %v1120, %v1211
        %v1261 = vadd.f32 %v1121, %v1210
        %v1262 = vadd.f32 %v1122, %v1214
        %v1263 = vadd.f32 %v1123, %v1216
        %v1264 = vadd.f32 %v1124, %v1215
        %v1265 = vld [vmem:[%s1024] sm:$0xe]
        %v1266 = vld [vmem:[%s1024 + $0x8] sm:$0xf]
        %v1267 = vld [vmem:[%s1024 + $0xc] sm:$0xe]
        %v1268 = vld [vmem:[%s1024 + $0x14] sm:$0xf]
        %v1269 = vld [vmem:[%s1024 + $0x18] sm:$0xe]
        %v1270 = vld [vmem:[%s1024 + $0x20] sm:$0xf]
        %v1271 = vld [vmem:[%s1024 + $0x24] sm:$0xe]
        %v1272 = vld [vmem:[%s1024 + $0x2c] sm:$0xf]
        %v1273 = vld [vmem:[%s1024 + $0x30] sm:$0xe]
        %v1274 = vld [vmem:[%s1024 + $0x38] sm:$0xf]
        %v1275 = vld [vmem:[%s1024 + $0x3c] sm:$0xe]
        %v1276 = vld [vmem:[%s1024 + $0x44] sm:$0xf]
        %v1277 = vld [vmem:[%s1024 + $0x48] sm:$0xe]
        %v1278 = vld [vmem:[%s1024 + $0x50] sm:$0xf]
        %v1279 = vld [vmem:[%s1024 + $0x54] sm:$0xe]
        %v1280 = vld [vmem:[%s1024 + $0x5c] sm:$0xf]
        %v1281 = vunpack.c.l.bf16 %v1265
        %v1282 = vunpack.c.l.bf16 %v1266
        %v1283 = vunpack.c.l.bf16 %v1267
        %v1284 = vunpack.c.l.bf16 %v1268
        %v1285 = vunpack.c.l.bf16 %v1269
        %v1286 = vunpack.c.l.bf16 %v1270
        %v1287 = vunpack.c.l.bf16 %v1271
        %v1288 = vunpack.c.l.bf16 %v1272
        %v1289 = vunpack.c.l.bf16 %v1273
        %v1290 = vunpack.c.l.bf16 %v1274
        %v1291 = vunpack.c.l.bf16 %v1275
        %v1292 = vunpack.c.l.bf16 %v1276
        %v1293 = vunpack.c.l.bf16 %v1277
        %v1294 = vunpack.c.l.bf16 %v1278
        %v1295 = vunpack.c.l.bf16 %v1279
        %v1296 = vunpack.c.l.bf16 %v1280
        %v1297 = vlaneseq
        %v1298 = vshrl.u32 %v1297, 7
        %v1299 = vsub.s32 0, %v1298
        %v1300 = vrot.slane %v187, %v1299
        %v1301 = vmul.f32 %v1281, %v1300
        %v1302 = vmul.f32 %v1050, %v1300
        %v1303 = vmul.f32 %v1282, %v1300
        %v1304 = vmul.f32 %v1283, %v1300
        %v1305 = vmul.f32 %v1053, %v1300
        %v1306 = vmul.f32 %v1284, %v1300
        %v1307 = vmul.f32 %v1285, %v1300
        %v1308 = vmul.f32 %v1056, %v1300
        %v1309 = vmul.f32 %v1286, %v1300
        %v1310 = vmul.f32 %v1287, %v1300
        %v1311 = vmul.f32 %v1059, %v1300
        %v1312 = vmul.f32 %v1288, %v1300
        %v1313 = vmul.f32 %v1289, %v1300
        %v1314 = vmul.f32 %v1062, %v1300
        %v1315 = vmul.f32 %v1290, %v1300
        %v1316 = vmul.f32 %v1291, %v1300
        %v1317 = vmul.f32 %v1065, %v1300
        %v1318 = vmul.f32 %v1292, %v1300
        %v1319 = vmul.f32 %v1293, %v1300
        %v1320 = vmul.f32 %v1068, %v1300
        %v1321 = vmul.f32 %v1294, %v1300
        %v1322 = vmul.f32 %v1295, %v1300
        %v1323 = vmul.f32 %v1071, %v1300
        %v1324 = vmul.f32 %v1296, %v1300
        %v1349 = vrot.slane %v1301, 2
        %v1350 = vrot.slane %v1302, 2
        %v1351 = vsel %vm516, %v1349, %v1350
        %v1352 = vrot.slane %v1303, 2
        %v1353 = vsel %vm516, %v1350, %v1352
        %v1354 = vrot.slane %v1304, 2
        %v1355 = vrot.slane %v1305, 2
        %v1356 = vsel %vm516, %v1354, %v1355
        %v1357 = vrot.slane %v1306, 2
        %v1358 = vsel %vm516, %v1355, %v1357
        %v1359 = vrot.slane %v1307, 2
        %v1360 = vrot.slane %v1308, 2
        %v1361 = vsel %vm516, %v1359, %v1360
        %v1362 = vrot.slane %v1309, 2
        %v1363 = vsel %vm516, %v1360, %v1362
        %v1364 = vrot.slane %v1310, 2
        %v1365 = vrot.slane %v1311, 2
        %v1366 = vsel %vm516, %v1364, %v1365
        %v1367 = vrot.slane %v1312, 2
        %v1368 = vsel %vm516, %v1365, %v1367
        %v1369 = vrot.slane %v1313, 2
        %v1370 = vrot.slane %v1314, 2
        %v1371 = vsel %vm516, %v1369, %v1370
        %v1372 = vrot.slane %v1315, 2
        %v1373 = vsel %vm516, %v1370, %v1372
        %v1374 = vrot.slane %v1316, 2
        %v1375 = vrot.slane %v1317, 2
        %v1376 = vsel %vm516, %v1374, %v1375
        %v1377 = vrot.slane %v1318, 2
        %v1378 = vsel %vm516, %v1375, %v1377
        %v1379 = vrot.slane %v1319, 2
        %v1380 = vrot.slane %v1320, 2
        %v1381 = vsel %vm516, %v1379, %v1380
        %v1382 = vrot.slane %v1321, 2
        %v1383 = vsel %vm516, %v1380, %v1382
        %v1384 = vrot.slane %v1322, 2
        %v1385 = vrot.slane %v1323, 2
        %v1386 = vsel %vm516, %v1384, %v1385
        %v1387 = vrot.slane %v1324, 2
        %v1388 = vsel %vm516, %v1385, %v1387
        %v1413 = vadd.f32 %v1241, %v1351
        %v1414 = vadd.f32 %v1242, %v1353
        %v1415 = vadd.f32 %v1243, %v1352
        %v1416 = vadd.f32 %v1244, %v1356
        %v1417 = vadd.f32 %v1245, %v1358
        %v1418 = vadd.f32 %v1246, %v1357
        %v1419 = vadd.f32 %v1247, %v1361
        %v1420 = vadd.f32 %v1248, %v1363
        %v1421 = vadd.f32 %v1249, %v1362
        %v1422 = vadd.f32 %v1250, %v1366
        %v1423 = vadd.f32 %v1251, %v1368
        %v1424 = vadd.f32 %v1252, %v1367
        %v1425 = vadd.f32 %v1253, %v1371
        %v1426 = vadd.f32 %v1254, %v1373
        %v1427 = vadd.f32 %v1255, %v1372
        %v1428 = vadd.f32 %v1256, %v1376
        %v1429 = vadd.f32 %v1257, %v1378
        %v1430 = vadd.f32 %v1258, %v1377
        %v1431 = vadd.f32 %v1259, %v1381
        %v1432 = vadd.f32 %v1260, %v1383
        %v1433 = vadd.f32 %v1261, %v1382
        %v1434 = vadd.f32 %v1262, %v1386
        %v1435 = vadd.f32 %v1263, %v1388
        %v1436 = vadd.f32 %v1264, %v1387
        %v1437 = vld [vmem:[%s2] sm:$0x1]
        %v1439 = vlaneseq
        %v1440 = vshrl.u32 %v1439, 7
        %v1441 = vsub.s32 0, %v1440
        %v1442 = vrot.slane %v1437, %v1441
        %v1444 = vadd.f32 %v1413, %v1442
        %v1445 = vadd.f32 %v1414, %v1442
        %v1446 = vadd.f32 %v1415, %v1442
        %v1447 = vadd.f32 %v1416, %v1442
        %v1448 = vadd.f32 %v1417, %v1442
        %v1449 = vadd.f32 %v1418, %v1442
        %v1450 = vadd.f32 %v1419, %v1442
        %v1451 = vadd.f32 %v1420, %v1442
        %v1452 = vadd.f32 %v1421, %v1442
        %v1453 = vadd.f32 %v1422, %v1442
        %v1454 = vadd.f32 %v1423, %v1442
        %v1455 = vadd.f32 %v1424, %v1442
        %v1456 = vadd.f32 %v1425, %v1442
        %v1457 = vadd.f32 %v1426, %v1442
        %v1458 = vadd.f32 %v1427, %v1442
        %v1459 = vadd.f32 %v1428, %v1442
        %v1460 = vadd.f32 %v1429, %v1442
        %v1461 = vadd.f32 %v1430, %v1442
        %v1462 = vadd.f32 %v1431, %v1442
        %v1463 = vadd.f32 %v1432, %v1442
        %v1464 = vadd.f32 %v1433, %v1442
        %v1465 = vadd.f32 %v1434, %v1442
        %v1466 = vadd.f32 %v1435, %v1442
        %v1467 = vadd.f32 %v1436, %v1442
        %v1468 = vxor.u32 %v1444, 2147483648
        %v1469 = vxor.u32 %v1445, 2147483648
        %v1470 = vxor.u32 %v1446, 2147483648
        %v1471 = vxor.u32 %v1447, 2147483648
        %v1472 = vxor.u32 %v1448, 2147483648
        %v1473 = vxor.u32 %v1449, 2147483648
        %v1474 = vxor.u32 %v1450, 2147483648
        %v1475 = vxor.u32 %v1451, 2147483648
        %v1476 = vxor.u32 %v1452, 2147483648
        %v1477 = vxor.u32 %v1453, 2147483648
        %v1478 = vxor.u32 %v1454, 2147483648
        %v1479 = vxor.u32 %v1455, 2147483648
        %v1480 = vxor.u32 %v1456, 2147483648
        %v1481 = vxor.u32 %v1457, 2147483648
        %v1482 = vxor.u32 %v1458, 2147483648
        %v1483 = vxor.u32 %v1459, 2147483648
        %v1484 = vxor.u32 %v1460, 2147483648
        %v1485 = vxor.u32 %v1461, 2147483648
        %v1486 = vxor.u32 %v1462, 2147483648
        %v1487 = vxor.u32 %v1463, 2147483648
        %v1488 = vxor.u32 %v1464, 2147483648
        %v1489 = vxor.u32 %v1465, 2147483648
        %v1490 = vxor.u32 %v1466, 2147483648
        %v1491 = vxor.u32 %v1467, 2147483648
        %v1492 = vmul.f32 %v1468, 1.442695
        %v1493 = vpow.pop %v1492
        %v1494 = vmul.f32 %v1469, 1.442695
        %v1495 = vpow.pop %v1494
        %v1496 = vmul.f32 %v1470, 1.442695
        %v1497 = vpow.pop %v1496
        %v1498 = vmul.f32 %v1471, 1.442695
        %v1499 = vpow.pop %v1498
        %v1500 = vmul.f32 %v1472, 1.442695
        %v1501 = vpow.pop %v1500
        %v1502 = vmul.f32 %v1473, 1.442695
        %v1503 = vpow.pop %v1502
        %v1504 = vmul.f32 %v1474, 1.442695
        %v1505 = vpow.pop %v1504
        %v1506 = vmul.f32 %v1475, 1.442695
        %v1507 = vpow.pop %v1506
        %v1508 = vmul.f32 %v1476, 1.442695
        %v1509 = vpow.pop %v1508
        %v1510 = vmul.f32 %v1477, 1.442695
        %v1511 = vpow.pop %v1510
        %v1512 = vmul.f32 %v1478, 1.442695
        %v1513 = vpow.pop %v1512
        %v1514 = vmul.f32 %v1479, 1.442695
        %v1515 = vpow.pop %v1514
        %v1516 = vmul.f32 %v1480, 1.442695
        %v1517 = vpow.pop %v1516
        %v1518 = vmul.f32 %v1481, 1.442695
        %v1519 = vpow.pop %v1518
        %v1520 = vmul.f32 %v1482, 1.442695
        %v1521 = vpow.pop %v1520
        %v1522 = vmul.f32 %v1483, 1.442695
        %v1523 = vpow.pop %v1522
        %v1524 = vmul.f32 %v1484, 1.442695
        %v1525 = vpow.pop %v1524
        %v1526 = vmul.f32 %v1485, 1.442695
        %v1527 = vpow.pop %v1526
        %v1528 = vmul.f32 %v1486, 1.442695
        %v1529 = vpow.pop %v1528
        %v1530 = vmul.f32 %v1487, 1.442695
        %v1531 = vpow.pop %v1530
        %v1532 = vmul.f32 %v1488, 1.442695
        %v1533 = vpow.pop %v1532
        %v1534 = vmul.f32 %v1489, 1.442695
        %v1535 = vpow.pop %v1534
        %v1536 = vmul.f32 %v1490, 1.442695
        %v1537 = vpow.pop %v1536
        %v1538 = vmul.f32 %v1491, 1.442695
        %v1539 = vpow.pop %v1538
        %v1540 = vadd.f32 %v1493, 1.0
        %v1541 = vadd.f32 %v1495, 1.0
        %v1542 = vadd.f32 %v1497, 1.0
        %v1543 = vadd.f32 %v1499, 1.0
        %v1544 = vadd.f32 %v1501, 1.0
        %v1545 = vadd.f32 %v1503, 1.0
        %v1546 = vadd.f32 %v1505, 1.0
        %v1547 = vadd.f32 %v1507, 1.0
        %v1548 = vadd.f32 %v1509, 1.0
        %v1549 = vadd.f32 %v1511, 1.0
        %v1550 = vadd.f32 %v1513, 1.0
        %v1551 = vadd.f32 %v1515, 1.0
        %v1552 = vadd.f32 %v1517, 1.0
        %v1553 = vadd.f32 %v1519, 1.0
        %v1554 = vadd.f32 %v1521, 1.0
        %v1555 = vadd.f32 %v1523, 1.0
        %v1556 = vadd.f32 %v1525, 1.0
        %v1557 = vadd.f32 %v1527, 1.0
        %v1558 = vadd.f32 %v1529, 1.0
        %v1559 = vadd.f32 %v1531, 1.0
        %v1560 = vadd.f32 %v1533, 1.0
        %v1561 = vadd.f32 %v1535, 1.0
        %v1562 = vadd.f32 %v1537, 1.0
        %v1563 = vadd.f32 %v1539, 1.0
        %v1564 = vrcp.pop %v1540
        %v1565 = vmul.f32 1.0, %v1564
        %v1566 = vrcp.pop %v1541
        %v1567 = vmul.f32 1.0, %v1566
        %v1568 = vrcp.pop %v1542
        %v1569 = vmul.f32 1.0, %v1568
        %v1570 = vrcp.pop %v1543
        %v1571 = vmul.f32 1.0, %v1570
        %v1572 = vrcp.pop %v1544
        %v1573 = vmul.f32 1.0, %v1572
        %v1574 = vrcp.pop %v1545
        %v1575 = vmul.f32 1.0, %v1574
        %v1576 = vrcp.pop %v1546
        %v1577 = vmul.f32 1.0, %v1576
        %v1578 = vrcp.pop %v1547
        %v1579 = vmul.f32 1.0, %v1578
        %v1580 = vrcp.pop %v1548
        %v1581 = vmul.f32 1.0, %v1580
        %v1582 = vrcp.pop %v1549
        %v1583 = vmul.f32 1.0, %v1582
        %v1584 = vrcp.pop %v1550
        %v1585 = vmul.f32 1.0, %v1584
        %v1586 = vrcp.pop %v1551
        %v1587 = vmul.f32 1.0, %v1586
        %v1588 = vrcp.pop %v1552
        %v1589 = vmul.f32 1.0, %v1588
        %v1590 = vrcp.pop %v1553
        %v1591 = vmul.f32 1.0, %v1590
        %v1592 = vrcp.pop %v1554
        %v1593 = vmul.f32 1.0, %v1592
        %v1594 = vrcp.pop %v1555
        %v1595 = vmul.f32 1.0, %v1594
        %v1596 = vrcp.pop %v1556
        %v1597 = vmul.f32 1.0, %v1596
        %v1598 = vrcp.pop %v1557
        %v1599 = vmul.f32 1.0, %v1598
        %v1600 = vrcp.pop %v1558
        %v1601 = vmul.f32 1.0, %v1600
        %v1602 = vrcp.pop %v1559
        %v1603 = vmul.f32 1.0, %v1602
        %v1604 = vrcp.pop %v1560
        %v1605 = vmul.f32 1.0, %v1604
        %v1606 = vrcp.pop %v1561
        %v1607 = vmul.f32 1.0, %v1606
        %v1608 = vrcp.pop %v1562
        %v1609 = vmul.f32 1.0, %v1608
        %v1610 = vrcp.pop %v1563
        %v1611 = vmul.f32 1.0, %v1610
        %v1612 = vmul.f32 %v1444, %v1565
        %v1613 = vmul.f32 %v1445, %v1567
        %v1614 = vmul.f32 %v1446, %v1569
        %v1615 = vmul.f32 %v1447, %v1571
        %v1616 = vmul.f32 %v1448, %v1573
        %v1617 = vmul.f32 %v1449, %v1575
        %v1618 = vmul.f32 %v1450, %v1577
        %v1619 = vmul.f32 %v1451, %v1579
        %v1620 = vmul.f32 %v1452, %v1581
        %v1621 = vmul.f32 %v1453, %v1583
        %v1622 = vmul.f32 %v1454, %v1585
        %v1623 = vmul.f32 %v1455, %v1587
        %v1624 = vmul.f32 %v1456, %v1589
        %v1625 = vmul.f32 %v1457, %v1591
        %v1626 = vmul.f32 %v1458, %v1593
        %v1627 = vmul.f32 %v1459, %v1595
        %v1628 = vmul.f32 %v1460, %v1597
        %v1629 = vmul.f32 %v1461, %v1599
        %v1630 = vmul.f32 %v1462, %v1601
        %v1631 = vmul.f32 %v1463, %v1603
        %v1632 = vmul.f32 %v1464, %v1605
        %v1633 = vmul.f32 %v1465, %v1607
        %v1634 = vmul.f32 %v1466, %v1609
        %v1635 = vmul.f32 %v1467, %v1611
        %v1636 = vpack.c.bf16 %v1613, %v1612
        %v1637 = vpack.c.bf16 %v1614, %v1614
        %v1638 = vpack.c.bf16 %v1616, %v1615
        %v1639 = vpack.c.bf16 %v1617, %v1617
        %v1640 = vpack.c.bf16 %v1619, %v1618
        %v1641 = vpack.c.bf16 %v1620, %v1620
        %v1642 = vpack.c.bf16 %v1622, %v1621
        %v1643 = vpack.c.bf16 %v1623, %v1623
        %v1644 = vpack.c.bf16 %v1625, %v1624
        %v1645 = vpack.c.bf16 %v1626, %v1626
        %v1646 = vpack.c.bf16 %v1628, %v1627
        %v1647 = vpack.c.bf16 %v1629, %v1629
        %v1648 = vpack.c.bf16 %v1631, %v1630
        %v1649 = vpack.c.bf16 %v1632, %v1632
        %v1650 = vpack.c.bf16 %v1634, %v1633
        %v1651 = vpack.c.bf16 %v1635, %v1635
        %v1668 = vunpack.c.l.b16 %v1636
        %v1669 = vunpack.c.h.b16 %v1636
        %v1670 = vunpack.c.l.b16 %v1637
        %v1671 = vunpack.c.l.b16 %v1638
        %v1672 = vunpack.c.h.b16 %v1638
        %v1673 = vunpack.c.l.b16 %v1639
        %v1674 = vunpack.c.l.b16 %v1640
        %v1675 = vunpack.c.h.b16 %v1640
        %v1676 = vunpack.c.l.b16 %v1641
        %v1677 = vunpack.c.l.b16 %v1642
        %v1678 = vunpack.c.h.b16 %v1642
        %v1679 = vunpack.c.l.b16 %v1643
        %v1680 = vunpack.c.l.b16 %v1644
        %v1681 = vunpack.c.h.b16 %v1644
        %v1682 = vunpack.c.l.b16 %v1645
        %v1683 = vunpack.c.l.b16 %v1646
        %v1684 = vunpack.c.h.b16 %v1646
        %v1685 = vunpack.c.l.b16 %v1647
        %v1686 = vunpack.c.l.b16 %v1648
        %v1687 = vunpack.c.h.b16 %v1648
        %v1688 = vunpack.c.l.b16 %v1649
        %v1689 = vunpack.c.l.b16 %v1650
        %v1690 = vunpack.c.h.b16 %v1650
        %v1691 = vunpack.c.l.b16 %v1651
        %v1692 = vpack.c.b16 %v1668, %v1668
        %v1693 = vpack.c.b16 %v1669, %v1669
        %v1694 = vpack.c.b16 %v1670, %v1670
        %v1695 = vpack.c.b16 %v1671, %v1671
        %v1696 = vpack.c.b16 %v1672, %v1672
        %v1697 = vpack.c.b16 %v1673, %v1673
        %v1698 = vpack.c.b16 %v1674, %v1674
        %v1699 = vpack.c.b16 %v1675, %v1675
        %v1700 = vpack.c.b16 %v1676, %v1676
        %v1701 = vpack.c.b16 %v1677, %v1677
        %v1702 = vpack.c.b16 %v1678, %v1678
        %v1703 = vpack.c.b16 %v1679, %v1679
        %v1704 = vpack.c.b16 %v1680, %v1680
        %v1705 = vpack.c.b16 %v1681, %v1681
        %v1706 = vpack.c.b16 %v1682, %v1682
        %v1707 = vpack.c.b16 %v1683, %v1683
        %v1708 = vpack.c.b16 %v1684, %v1684
        %v1709 = vpack.c.b16 %v1685, %v1685
        %v1710 = vpack.c.b16 %v1686, %v1686
        %v1711 = vpack.c.b16 %v1687, %v1687
        %v1712 = vpack.c.b16 %v1688, %v1688
        %v1713 = vpack.c.b16 %v1689, %v1689
        %v1714 = vpack.c.b16 %v1690, %v1690
        %v1715 = vpack.c.b16 %v1691, %v1691
        %vm1740 = vcmask 257024
        %1741 = vst.msk [vmem:[%s173] sm:$0xf] %vm1740, %v1692
        %1742 = vst.msk [vmem:[%s173 + $0x4] sm:$0xf] %vm1740, %v1693
        %vm1743 = vcmask 256000
        %vm1744 = vsmask.f32 2304
        %vm1745 = vmand %vm1743, %vm1744
        %v1746 = vld [vmem:[%s173 + $0x8] sm:$0x7]
        %v1747 = vsel %vm1745, %v1694, %v1746
        %1748 = vst [vmem:[%s173 + $0x8] sm:$0x7] %v1747
        %1749 = vst.msk [vmem:[%s173 + $0xc] sm:$0xf] %vm1740, %v1695
        %1750 = vst.msk [vmem:[%s173 + $0x10] sm:$0xf] %vm1740, %v1696
        %v1751 = vld [vmem:[%s173 + $0x14] sm:$0x7]
        %v1752 = vsel %vm1745, %v1697, %v1751
        %1753 = vst [vmem:[%s173 + $0x14] sm:$0x7] %v1752
        %1754 = vst.msk [vmem:[%s173 + $0x18] sm:$0xf] %vm1740, %v1698
        %1755 = vst.msk [vmem:[%s173 + $0x1c] sm:$0xf] %vm1740, %v1699
        %v1756 = vld [vmem:[%s173 + $0x20] sm:$0x7]
        %v1757 = vsel %vm1745, %v1700, %v1756
        %1758 = vst [vmem:[%s173 + $0x20] sm:$0x7] %v1757
        %1759 = vst.msk [vmem:[%s173 + $0x24] sm:$0xf] %vm1740, %v1701
        %1760 = vst.msk [vmem:[%s173 + $0x28] sm:$0xf] %vm1740, %v1702
        %v1761 = vld [vmem:[%s173 + $0x2c] sm:$0x7]
        %v1762 = vsel %vm1745, %v1703, %v1761
        %1763 = vst [vmem:[%s173 + $0x2c] sm:$0x7] %v1762
        %1764 = vst.msk [vmem:[%s173 + $0x30] sm:$0xf] %vm1740, %v1704
        %1765 = vst.msk [vmem:[%s173 + $0x34] sm:$0xf] %vm1740, %v1705
        %v1766 = vld [vmem:[%s173 + $0x38] sm:$0x7]
        %v1767 = vsel %vm1745, %v1706, %v1766
        %1768 = vst [vmem:[%s173 + $0x38] sm:$0x7] %v1767
        %1769 = vst.msk [vmem:[%s173 + $0x3c] sm:$0xf] %vm1740, %v1707
        %1770 = vst.msk [vmem:[%s173 + $0x40] sm:$0xf] %vm1740, %v1708
        %v1771 = vld [vmem:[%s173 + $0x44] sm:$0x7]
        %v1772 = vsel %vm1745, %v1709, %v1771
        %1773 = vst [vmem:[%s173 + $0x44] sm:$0x7] %v1772
        %1774 = vst.msk [vmem:[%s173 + $0x48] sm:$0xf] %vm1740, %v1710
        %1775 = vst.msk [vmem:[%s173 + $0x4c] sm:$0xf] %vm1740, %v1711
        %v1776 = vld [vmem:[%s173 + $0x50] sm:$0x7]
        %v1777 = vsel %vm1745, %v1712, %v1776
        %1778 = vst [vmem:[%s173 + $0x50] sm:$0x7] %v1777
        %1779 = vst.msk [vmem:[%s173 + $0x54] sm:$0xf] %vm1740, %v1713
        %1780 = vst.msk [vmem:[%s173 + $0x58] sm:$0xf] %vm1740, %v1714
        %v1781 = vld [vmem:[%s173 + $0x5c] sm:$0x7]
        %v1782 = vsel %vm1745, %v1715, %v1781
        %1783 = vst [vmem:[%s173 + $0x5c] sm:$0x7] %v1782
        %s1784 = sand.u32 %s104, 1
        %s1785 = sand.u32 %s104, 1
        %s1786 = smul.addr %s1785, 96
        %s1787 = scalar_lea.vmem [#allocation2], %s1786
        // Predicated region
        $region33: #{tpu_custom_call.1} parent=31 // pred_check
          %p1788 = pneg %p114
        $region34: #{tpu_custom_call.1} parent=31 // pred_check_branch
          %1790 = sbr.rel (%p1788) target = $region36
        $region35: #{tpu_custom_call.1} parent=31 // pred_region
          %s1791 = smul.u32 8, %s19
          %s1792 = ssub.s32 19, %s1791
          %p1793 = scmp.lt.s32.totalorder %s1792, 8
          %s1794 = scalar_select %p1793, %s1792, 8
          %s1795 = smul.u32 64, %s1794
          %s1796 = smul.u32 %s1795, 3
          %p1797 = scmp.ne.s32.totalorder 0, %s1796
          %s1798 = smul.addr %s1791, 3
          %s1799 = smul.addr %s18, 57
          %s1800 = sadd.s32 %s1798, %s1799
          %s1801 = smul.addr %s1800, 4
          %s1802 = scalar_lea.vmem %s3, %s1801
          %s1803 = smul.u32 %s1794, 3
          // Predicated region
          $region37: #{tpu_custom_call.1} parent=35 // pred_check
            %p1804 = pneg %p1797
          $region38: #{tpu_custom_call.1} parent=35 // pred_check_branch
            %1806 = sbr.rel (%p1804) target = $region40
          $region39: #{tpu_custom_call.1} parent=35 // pred_region
            // Predicated region
            $region41: #{tpu_custom_call.1} parent=39 // pred_check
              _
            $region42: #{tpu_custom_call.1} parent=39 // pred_check_branch
              %1808 = sbr.rel target = $region44
            $region43: #{tpu_custom_call.1} parent=39 // pred_region
              // Predicated region
              $region63: #{tpu_custom_call.1} parent=43 // pred_check
                _
              $region64: #{tpu_custom_call.1} parent=43 // pred_check_branch
                %1904 = sbr.rel (0) target = $region66
              $region65: #{tpu_custom_call.1} parent=43 // pred_region
                %s1906 = sdiv.u32.pop %s1803, 24
                %s1907 = srem.u32.pop %s1803, 24
                // While loop
                $region67: #{tpu_custom_call.1} parent=65 // loop_pre_header
                  _
                $region68: #{tpu_custom_call.1} parent=65 // loop_header
                  %s1909 = sphi 0, %s1911
                  %p1910 = scmp.ge.s32.totalorder %s1909, %s1906
                  %s1914 = sphi 0, %s1967
                  %s1915 = sphi %s1787, %s1970
                  %s1916 = sphi %s1802, %s1971
                $region69: #{tpu_custom_call.1} parent=65 // loop_header_branch
                  %1913 = sbr.rel (%p1910) target = $region73
                $region70: #{tpu_custom_call.1} parent=65 // loop_body
                  %v1917 = vld [vmem:[%s1915] sm:$0xf]
                  %1918 = vst [vmem:[%s1916] sm:$0xf] %v1917
                  %v1919 = vld [vmem:[%s1915 + $0x4] sm:$0xf]
                  %1920 = vst [vmem:[%s1916 + $0x4] sm:$0xf] %v1919
                  %v1921 = vld [vmem:[%s1915 + $0x8] sm:$0xf]
                  %1922 = vst [vmem:[%s1916 + $0x8] sm:$0xf] %v1921
                  %v1923 = vld [vmem:[%s1915 + $0xc] sm:$0xf]
                  %1924 = vst [vmem:[%s1916 + $0xc] sm:$0xf] %v1923
                  %v1925 = vld [vmem:[%s1915 + $0x10] sm:$0xf]
                  %1926 = vst [vmem:[%s1916 + $0x10] sm:$0xf] %v1925
                  %v1927 = vld [vmem:[%s1915 + $0x14] sm:$0xf]
                  %1928 = vst [vmem:[%s1916 + $0x14] sm:$0xf] %v1927
                  %v1929 = vld [vmem:[%s1915 + $0x18] sm:$0xf]
                  %1930 = vst [vmem:[%s1916 + $0x18] sm:$0xf] %v1929
                  %v1931 = vld [vmem:[%s1915 + $0x1c] sm:$0xf]
                  %1932 = vst [vmem:[%s1916 + $0x1c] sm:$0xf] %v1931
                  %v1933 = vld [vmem:[%s1915 + $0x20] sm:$0xf]
                  %1934 = vst [vmem:[%s1916 + $0x20] sm:$0xf] %v1933
                  %v1935 = vld [vmem:[%s1915 + $0x24] sm:$0xf]
                  %1936 = vst [vmem:[%s1916 + $0x24] sm:$0xf] %v1935
                  %v1937 = vld [vmem:[%s1915 + $0x28] sm:$0xf]
                  %1938 = vst [vmem:[%s1916 + $0x28] sm:$0xf] %v1937
                  %v1939 = vld [vmem:[%s1915 + $0x2c] sm:$0xf]
                  %1940 = vst [vmem:[%s1916 + $0x2c] sm:$0xf] %v1939
                  %v1941 = vld [vmem:[%s1915 + $0x30] sm:$0xf]
                  %1942 = vst [vmem:[%s1916 + $0x30] sm:$0xf] %v1941
                  %v1943 = vld [vmem:[%s1915 + $0x34] sm:$0xf]
                  %1944 = vst [vmem:[%s1916 + $0x34] sm:$0xf] %v1943
                  %v1945 = vld [vmem:[%s1915 + $0x38] sm:$0xf]
                  %1946 = vst [vmem:[%s1916 + $0x38] sm:$0xf] %v1945
                  %v1947 = vld [vmem:[%s1915 + $0x3c] sm:$0xf]
                  %1948 = vst [vmem:[%s1916 + $0x3c] sm:$0xf] %v1947
                  %v1949 = vld [vmem:[%s1915 + $0x40] sm:$0xf]
                  %1950 = vst [vmem:[%s1916 + $0x40] sm:$0xf] %v1949
                  %v1951 = vld [vmem:[%s1915 + $0x44] sm:$0xf]
                  %1952 = vst [vmem:[%s1916 + $0x44] sm:$0xf] %v1951
                  %v1953 = vld [vmem:[%s1915 + $0x48] sm:$0xf]
                  %1954 = vst [vmem:[%s1916 + $0x48] sm:$0xf] %v1953
                  %v1955 = vld [vmem:[%s1915 + $0x4c] sm:$0xf]
                  %1956 = vst [vmem:[%s1916 + $0x4c] sm:$0xf] %v1955
                  %v1957 = vld [vmem:[%s1915 + $0x50] sm:$0xf]
                  %1958 = vst [vmem:[%s1916 + $0x50] sm:$0xf] %v1957
                  %v1959 = vld [vmem:[%s1915 + $0x54] sm:$0xf]
                  %1960 = vst [vmem:[%s1916 + $0x54] sm:$0xf] %v1959
                  %v1961 = vld [vmem:[%s1915 + $0x58] sm:$0xf]
                  %1962 = vst [vmem:[%s1916 + $0x58] sm:$0xf] %v1961
                  %v1963 = vld [vmem:[%s1915 + $0x5c] sm:$0xf]
                  %1964 = vst [vmem:[%s1916 + $0x5c] sm:$0xf] %v1963
                  %s1965 = sadd.s32 1, %s1914
                  %p1966 = scmp.ge.s32.totalorder %s1965, %s1906
                  %s1967 = scalar_select %p1966, 0, %s1965
                  %s1968 = smul.u32 %s1967, 96
                  %s1969 = smul.u32 %s1967, 96
                  %s1970 = scalar_lea.vmem %s1787, %s1968 [#allocation2]
                  %s1971 = scalar_lea.vmem %s1802, %s1969
                $region71: #{tpu_custom_call.1} parent=65 // loop_footer
                  %s1911 = sadd.s32 %s1909, 1
                $region72: #{tpu_custom_call.1} parent=65 // loop_footer_branch
                  %1908 = sbr.rel target = $region68
                $region73: #{tpu_custom_call.1} parent=65 // loop_exit
                  _
                %s1972 = sdiv.u32.pop %s1803, 24
                %s1973 = srem.u32.pop %s1803, 24
                %s1974 = smul.u32 %s1972, 24
                %s1975 = smul.u32 4, %s1974
                %s1976 = scalar_lea.vmem %s1787, %s1975 [#allocation2]
                %s1977 = smul.u32 4, %s1974
                %s1978 = scalar_lea.vmem %s1802, %s1977
                // While loop
                $region74: #{tpu_custom_call.1} parent=65 // loop_pre_header
                  _
                $region75: #{tpu_custom_call.1} parent=65 // loop_header
                  %s1980 = sphi 0, %s1982
                  %p1981 = scmp.ge.s32.totalorder %s1980, %s1973
                  %s1985 = sphi 0, %s1992
                  %s1986 = sphi %s1976, %s1995
                  %s1987 = sphi %s1978, %s1996
                $region76: #{tpu_custom_call.1} parent=65 // loop_header_branch
                  %1984 = sbr.rel (%p1981) target = $region80
                $region77: #{tpu_custom_call.1} parent=65 // loop_body
                  %v1988 = vld [vmem:[%s1986] sm:$0xf]
                  %1989 = vst [vmem:[%s1987] sm:$0xf] %v1988
                  %s1990 = sadd.s32 1, %s1985
                  %p1991 = scmp.ge.s32.totalorder %s1990, %s1973
                  %s1992 = scalar_select %p1991, 0, %s1990
                  %s1993 = smul.u32 %s1992, 4
                  %s1994 = smul.u32 %s1992, 4
                  %s1995 = scalar_lea.vmem %s1976, %s1993 [#allocation2]
                  %s1996 = scalar_lea.vmem %s1978, %s1994
                $region78: #{tpu_custom_call.1} parent=65 // loop_footer
                  %s1982 = sadd.s32 %s1980, 1
                $region79: #{tpu_custom_call.1} parent=65 // loop_footer_branch
                  %1979 = sbr.rel target = $region75
                $region80: #{tpu_custom_call.1} parent=65 // loop_exit
                  _
              $region66: #{tpu_custom_call.1} parent=43 // pred_fallthru
                _
            $region44: #{tpu_custom_call.1} parent=39 // pred_fallthru
              _
            // Predicated region
            $region45: #{tpu_custom_call.1} parent=39 // pred_check
              _
            $region46: #{tpu_custom_call.1} parent=39 // pred_check_branch
              %1810 = sbr.rel (0) target = $region48
            $region47: #{tpu_custom_call.1} parent=39 // pred_region
              %s1812 = sdiv.u32.pop %s1803, 24
              %s1813 = srem.u32.pop %s1803, 24
              // While loop
              $region49: #{tpu_custom_call.1} parent=47 // loop_pre_header
                _
              $region50: #{tpu_custom_call.1} parent=47 // loop_header
                %s1815 = sphi 0, %s1817
                %p1816 = scmp.ge.s32.totalorder %s1815, %s1812
                %s1820 = sphi 0, %s1873
                %s1821 = sphi %s1787, %s1876
                %s1822 = sphi %s1802, %s1877
              $region51: #{tpu_custom_call.1} parent=47 // loop_header_branch
                %1819 = sbr.rel (%p1816) target = $region55
              $region52: #{tpu_custom_call.1} parent=47 // loop_body
                %v1823 = vld [vmem:[%s1821] sm:$0xf]
                %1824 = vst [vmem:[%s1822] sm:$0xf] %v1823
                %v1825 = vld [vmem:[%s1821 + $0x4] sm:$0xf]
                %1826 = vst [vmem:[%s1822 + $0x4] sm:$0xf] %v1825
                %v1827 = vld [vmem:[%s1821 + $0x8] sm:$0xf]
                %1828 = vst [vmem:[%s1822 + $0x8] sm:$0xf] %v1827
                %v1829 = vld [vmem:[%s1821 + $0xc] sm:$0xf]
                %1830 = vst [vmem:[%s1822 + $0xc] sm:$0xf] %v1829
                %v1831 = vld [vmem:[%s1821 + $0x10] sm:$0xf]
                %1832 = vst [vmem:[%s1822 + $0x10] sm:$0xf] %v1831
                %v1833 = vld [vmem:[%s1821 + $0x14] sm:$0xf]
                %1834 = vst [vmem:[%s1822 + $0x14] sm:$0xf] %v1833
                %v1835 = vld [vmem:[%s1821 + $0x18] sm:$0xf]
                %1836 = vst [vmem:[%s1822 + $0x18] sm:$0xf] %v1835
                %v1837 = vld [vmem:[%s1821 + $0x1c] sm:$0xf]
                %1838 = vst [vmem:[%s1822 + $0x1c] sm:$0xf] %v1837
                %v1839 = vld [vmem:[%s1821 + $0x20] sm:$0xf]
                %1840 = vst [vmem:[%s1822 + $0x20] sm:$0xf] %v1839
                %v1841 = vld [vmem:[%s1821 + $0x24] sm:$0xf]
                %1842 = vst [vmem:[%s1822 + $0x24] sm:$0xf] %v1841
                %v1843 = vld [vmem:[%s1821 + $0x28] sm:$0xf]
                %1844 = vst [vmem:[%s1822 + $0x28] sm:$0xf] %v1843
                %v1845 = vld [vmem:[%s1821 + $0x2c] sm:$0xf]
                %1846 = vst [vmem:[%s1822 + $0x2c] sm:$0xf] %v1845
                %v1847 = vld [vmem:[%s1821 + $0x30] sm:$0xf]
                %1848 = vst [vmem:[%s1822 + $0x30] sm:$0xf] %v1847
                %v1849 = vld [vmem:[%s1821 + $0x34] sm:$0xf]
                %1850 = vst [vmem:[%s1822 + $0x34] sm:$0xf] %v1849
                %v1851 = vld [vmem:[%s1821 + $0x38] sm:$0xf]
                %1852 = vst [vmem:[%s1822 + $0x38] sm:$0xf] %v1851
                %v1853 = vld [vmem:[%s1821 + $0x3c] sm:$0xf]
                %1854 = vst [vmem:[%s1822 + $0x3c] sm:$0xf] %v1853
                %v1855 = vld [vmem:[%s1821 + $0x40] sm:$0xf]
                %1856 = vst [vmem:[%s1822 + $0x40] sm:$0xf] %v1855
                %v1857 = vld [vmem:[%s1821 + $0x44] sm:$0xf]
                %1858 = vst [vmem:[%s1822 + $0x44] sm:$0xf] %v1857
                %v1859 = vld [vmem:[%s1821 + $0x48] sm:$0xf]
                %1860 = vst [vmem:[%s1822 + $0x48] sm:$0xf] %v1859
                %v1861 = vld [vmem:[%s1821 + $0x4c] sm:$0xf]
                %1862 = vst [vmem:[%s1822 + $0x4c] sm:$0xf] %v1861
                %v1863 = vld [vmem:[%s1821 + $0x50] sm:$0xf]
                %1864 = vst [vmem:[%s1822 + $0x50] sm:$0xf] %v1863
                %v1865 = vld [vmem:[%s1821 + $0x54] sm:$0xf]
                %1866 = vst [vmem:[%s1822 + $0x54] sm:$0xf] %v1865
                %v1867 = vld [vmem:[%s1821 + $0x58] sm:$0xf]
                %1868 = vst [vmem:[%s1822 + $0x58] sm:$0xf] %v1867
                %v1869 = vld [vmem:[%s1821 + $0x5c] sm:$0xf]
                %1870 = vst [vmem:[%s1822 + $0x5c] sm:$0xf] %v1869
                %s1871 = sadd.s32 1, %s1820
                %p1872 = scmp.ge.s32.totalorder %s1871, %s1812
                %s1873 = scalar_select %p1872, 0, %s1871
                %s1874 = smul.u32 %s1873, 96
                %s1875 = smul.u32 %s1873, 96
                %s1876 = scalar_lea.vmem %s1787, %s1874 [#allocation2]
                %s1877 = scalar_lea.vmem %s1802, %s1875
              $region53: #{tpu_custom_call.1} parent=47 // loop_footer
                %s1817 = sadd.s32 %s1815, 1
              $region54: #{tpu_custom_call.1} parent=47 // loop_footer_branch
                %1814 = sbr.rel target = $region50
              $region55: #{tpu_custom_call.1} parent=47 // loop_exit
                _
              %s1878 = sdiv.u32.pop %s1803, 24
              %s1879 = srem.u32.pop %s1803, 24
              %s1880 = smul.u32 %s1878, 24
              %s1881 = smul.u32 4, %s1880
              %s1882 = scalar_lea.vmem %s1787, %s1881 [#allocation2]
              %s1883 = smul.u32 4, %s1880
              %s1884 = scalar_lea.vmem %s1802, %s1883
              // While loop
              $region56: #{tpu_custom_call.1} parent=47 // loop_pre_header
                _
              $region57: #{tpu_custom_call.1} parent=47 // loop_header
                %s1886 = sphi 0, %s1888
                %p1887 = scmp.ge.s32.totalorder %s1886, %s1879
                %s1891 = sphi 0, %s1898
                %s1892 = sphi %s1882, %s1901
                %s1893 = sphi %s1884, %s1902
              $region58: #{tpu_custom_call.1} parent=47 // loop_header_branch
                %1890 = sbr.rel (%p1887) target = $region62
              $region59: #{tpu_custom_call.1} parent=47 // loop_body
                %v1894 = vld [vmem:[%s1892] sm:$0xf]
                %1895 = vst [vmem:[%s1893] sm:$0xf] %v1894
                %s1896 = sadd.s32 1, %s1891
                %p1897 = scmp.ge.s32.totalorder %s1896, %s1879
                %s1898 = scalar_select %p1897, 0, %s1896
                %s1899 = smul.u32 %s1898, 4
                %s1900 = smul.u32 %s1898, 4
                %s1901 = scalar_lea.vmem %s1882, %s1899 [#allocation2]
                %s1902 = scalar_lea.vmem %s1884, %s1900
              $region60: #{tpu_custom_call.1} parent=47 // loop_footer
                %s1888 = sadd.s32 %s1886, 1
              $region61: #{tpu_custom_call.1} parent=47 // loop_footer_branch
                %1885 = sbr.rel target = $region57
              $region62: #{tpu_custom_call.1} parent=47 // loop_exit
                _
            $region48: #{tpu_custom_call.1} parent=39 // pred_fallthru
              _
          $region40: #{tpu_custom_call.1} parent=35 // pred_fallthru
            _
          %1997 = vnop
        $region36: #{tpu_custom_call.1} parent=31 // pred_fallthru
          _
      $region32: #{tpu_custom_call.1} parent=5 // pred_fallthru
        _
      %p1998 = scmp.le.s32.totalorder 2, %s9
      // Predicated region
      $region81: #{tpu_custom_call.1} parent=5 // pred_check
        %p1999 = pneg %p1998
      $region82: #{tpu_custom_call.1} parent=5 // pred_check_branch
        %2001 = sbr.rel (%p1999) target = $region84
      $region83: #{tpu_custom_call.1} parent=5 // pred_region
        %s2002 = ssub.s32 %s9, 2
        // Predicated region
        $region85: #{tpu_custom_call.1} parent=83 // pred_check
          %p2003 = pneg %p120
        $region86: #{tpu_custom_call.1} parent=83 // pred_check_branch
          %2005 = sbr.rel (%p2003) target = $region88
        $region87: #{tpu_custom_call.1} parent=83 // pred_region
          %s2006 = sand.u32 %s105, 1
          %s2007 = sand.u32 %s105, 1
          %s2008 = smul.addr %s2007, 96
          %s2009 = scalar_lea.vmem [#allocation2], %s2008
        $region88: #{tpu_custom_call.1} parent=83 // pred_fallthru
          _
      $region84: #{tpu_custom_call.1} parent=5 // pred_fallthru
        _
    $region6: #{tpu_custom_call.1} parent=1 // loop_footer
      %s13 = sadd.s32 1, %s9
    $region7: #{tpu_custom_call.1} parent=1 // loop_footer_branch
      %8 = sbr.rel target = $region3
    $region8: #{tpu_custom_call.1} parent=1 // loop_exit
      _

</llo_original>
